<compile_context>
chip_gen: v7x
topology: tpu7x:2x2x1
jax: 0.10.0
libtpu: 0.0.40
codegen_flags: <defaults>
</compile_context>

<pallas_src>
import functools

import jax
import jax.numpy as jnp
import numpy as np
from jax import lax
from jax.experimental import pallas as pl
from jax.experimental.pallas import tpu as pltpu


_UNROLL = 8        # timesteps per pl.loop body iteration (inner unroll)
_MAX_CHUNK = 256   # hard cap on timesteps per grid step


# ----------------------------------------------------------------------------
# VMEM-aware chunk sizing
# ----------------------------------------------------------------------------
def _vmem_budget_bytes():
    """Per-kernel VMEM budget used to size the time chunk (chip aware)."""
    try:
        cap = pltpu.get_tpu_info().vmem_capacity_bytes
    except Exception:
        cap = 64 << 20                      # assume the tightest chip (v7x TC)
    return int(min(cap // 3, 48 << 20))


def _chunk_bytes(tc, b, h):
    """Double-buffered VMEM footprint of one recurrence grid step."""
    bf16 = 2
    pre_blk = tc * b * 4 * h * bf16         # one direction's pre-activation chunk
    out_blk = tc * b * h * bf16             # one direction's output chunk
    whh_blk = 2 * h * 4 * h * bf16          # both directions' recurrent weights
    scratch = 4 * b * h * 4                 # f32 h/c state, two directions
    return 2 * (2 * pre_blk + 2 * out_blk) + 2 * whh_blk + scratch


def _pick_chunk(t, b, h):
    """Largest chunk (<= cap, multiple of the unroll) fitting the VMEM budget.
    tc no longer has to divide t; the caller pads the time axis."""
    budget = _vmem_budget_bytes()
    fixed = _chunk_bytes(0, b, h)
    per_t = _chunk_bytes(1, b, h) - fixed
    tc = max(1, min(_MAX_CHUNK, t, (budget - fixed) // per_t))
    if tc > _UNROLL:
        tc = (tc // _UNROLL) * _UNROLL      # keep the inner unroll exact
    return int(tc)


# ----------------------------------------------------------------------------
# Pallas kernel: interleaved forward+backward LSTM recurrence over
# pre-projected inputs.  Grid = (time-chunk,), sequential ("arbitrary");
# h/c state for both directions is carried in VMEM scratch.
# ----------------------------------------------------------------------------
def _bilstm_rec_kernel(pre_f_ref, pre_b_ref, whh_ref,
                       out_f_ref, out_b_ref,
                       h_f, c_f, h_b, c_b, *, hidden, chunk):
    step_idx = pl.program_id(0)

    @pl.when(step_idx == 0)
    def _():
        h_f[...] = jnp.zeros_like(h_f)
        c_f[...] = jnp.zeros_like(c_f)
        h_b[...] = jnp.zeros_like(h_b)
        c_b[...] = jnp.zeros_like(c_b)

    whh_f = whh_ref[0]       # (H, 4H) bf16, resident for the whole grid
    whh_b = whh_ref[1]
    H = hidden

    def cell(pre_t, h_prev, c_prev, whh):
        # Only the (B,H)x(H,4H) matmul sits on the serial critical path.
        # bf16 MXU with f32 accumulation; W_ih projection + bias precomputed.
        gates = pre_t.astype(jnp.float32) + jnp.dot(
            h_prev.astype(jnp.bfloat16), whh, preferred_element_type=jnp.float32)
        # TODO(synk): for H < 128 these slices cross lane boundaries; pad H to a
        # multiple of 128 for production shapes.
        i_g = jax.nn.sigmoid(gates[:, 0 * H:1 * H])
        f_g = jax.nn.sigmoid(gates[:, 1 * H:2 * H])
        g_g = jnp.tanh(gates[:, 2 * H:3 * H])
        o_g = jax.nn.sigmoid(gates[:, 3 * H:4 * H])
        c_new = f_g * c_prev + i_g * g_g
        h_new = o_g * jnp.tanh(c_new)
        return h_new, c_new

    def one_step(i):
        # fwd walks the chunk left->right; bwd walks the mirrored position.
        # Two independent chains per step -> ILP that hides per-step MXU/EUP
        # latency on single-TensorCore chips (v5e/v6e).
        j = chunk - 1 - i
        hf_new, cf_new = cell(pre_f_ref[i], h_f[...], c_f[...], whh_f)
        hb_new, cb_new = cell(pre_b_ref[j], h_b[...], c_b[...], whh_b)
        h_f[...] = hf_new
        c_f[...] = cf_new
        h_b[...] = hb_new
        c_b[...] = cb_new
        out_f_ref[i] = hf_new.astype(out_f_ref.dtype)
        out_b_ref[j] = hb_new.astype(out_b_ref.dtype)

    if chunk <= _UNROLL:
        # Small static trip count: full unroll (capped at _UNROLL to bound
        # live ranges / avoid vreg spills at large B*H).
        for i in range(chunk):
            one_step(i)
    else:
        @pl.loop(0, chunk // _UNROLL)
        def _(blk):
            base = blk * _UNROLL
            for k in range(_UNROLL):        # partial unroll: LLO visibility
                one_step(base + k)


def _bilstm_recurrence(pre, whh, hidden_dim):
    """Interleaved bidirectional LSTM recurrence.

    pre : (2, T, B, 4H) bf16  precomputed  x @ W_ih + (b_ih + b_hh)   (dir 0=fwd, 1=bwd)
    whh : (2, H, 4H)    bf16
    Returns (out_fwd, out_bwd), each (Tp, B, H) bf16 with hidden states at their
    original time positions; Tp >= T is the chunk-padded length (tail is garbage).
    """
    _, T, B, G = pre.shape
    H = hidden_dim
    tc = _pick_chunk(T, B, H)
    nc = int(pl.cdiv(T, tc))
    Tp = nc * tc
    if Tp != T:
        # Zero padding keeps the (zero-initialized) LSTM state exactly zero
        # through the padded prefix of the backward walk: g = tanh(0) = 0.
        pre = jnp.pad(pre, ((0, 0), (0, Tp - T), (0, 0), (0, 0)))

    kernel = functools.partial(_bilstm_rec_kernel, hidden=H, chunk=tc)
    need = _chunk_bytes(tc, B, H)
    vmem_limit = int(min(max(need + (4 << 20), 32 << 20), 56 << 20))

    out_sds = jax.ShapeDtypeStruct((Tp, B, H), jnp.bfloat16)
    return pl.pallas_call(
        kernel,
        out_shape=(out_sds, out_sds),
        grid_spec=pltpu.PrefetchScalarGridSpec(
            num_scalar_prefetch=0,
            grid=(nc,),
            in_specs=[
                # forward pre-activations: chunk c of direction 0
                pl.BlockSpec((None, tc, B, G), lambda c: (0, c, 0, 0)),
                # backward pre-activations: time reversal folded into the
                # index_map (chunk nc-1-c of direction 1); no reversed HBM copy
                pl.BlockSpec((None, tc, B, G), lambda c: (1, nc - 1 - c, 0, 0)),
                # recurrent weights (both directions), same block every step.
                # TODO(synk): pipeline_mode=pl.Buffered(1) would drop the
                # redundant second weight buffer (extra VMEM headroom on v7x).
                pl.BlockSpec((2, H, G), lambda c: (0, 0, 0)),
            ],
            out_specs=(
                pl.BlockSpec((tc, B, H), lambda c: (c, 0, 0)),
                pl.BlockSpec((tc, B, H), lambda c: (nc - 1 - c, 0, 0)),
            ),
            scratch_shapes=[pltpu.VMEM((B, H), jnp.float32)] * 4,  # h_f,c_f,h_b,c_b
        ),
        compiler_params=pltpu.CompilerParams(
            dimension_semantics=("arbitrary",),
            vmem_limit_bytes=vmem_limit),
    )(pre, pre, whh)


# ----------------------------------------------------------------------------
# Input projections (large bf16 GEMMs outside the sequential kernel)
# ----------------------------------------------------------------------------
def _project_from_batch_first(x, wih, b, H):
    """x: (B, T, F) batch-first.  Returns (2, T//2, B, 4H) bf16 pre-activations.
    Adjacent-timestep concat and batch-first -> time-major are folded in."""
    B, T, F = x.shape
    xp = x.reshape(B, T // 2, 2, F).astype(jnp.bfloat16)
    w = wih.reshape(2, 2, F, 4 * H).astype(jnp.bfloat16)
    pre = jnp.einsum("btpf,dpfg->dtbg", xp, w,
                     preferred_element_type=jnp.float32)
    pre = pre + b[:, None, None, :]
    return pre.astype(jnp.bfloat16)


def _project_from_dir_split(h_f, h_b, wih, b, H):
    """h_f / h_b: (T, B, Hin) time-major per-direction outputs of the previous
    layer; consumed directly (no concat materialized in HBM).
    Returns (2, T//2, B, 4H) bf16 pre-activations."""
    T, B, Hin = h_f.shape
    w = wih.reshape(2, 2, 2, Hin, 4 * H).astype(jnp.bfloat16)   # (d, pair, dir_prev, Hin, 4H)
    hf_p = h_f.reshape(T // 2, 2, B, Hin)
    hb_p = h_b.reshape(T // 2, 2, B, Hin)
    pre = (jnp.einsum("tpbh,dphg->dtbg", hf_p, w[:, :, 0],
                      preferred_element_type=jnp.float32)
           + jnp.einsum("tpbh,dphg->dtbg", hb_p, w[:, :, 1],
                        preferred_element_type=jnp.float32))
    pre = pre + b[:, None, None, :]
    return pre.astype(jnp.bfloat16)


# ----------------------------------------------------------------------------
# Listener forward
# ----------------------------------------------------------------------------
def listener_forward(x, params, hidden_dim):
    """Listener.forward.  x: (B, T, F) batch-first, T % 4 == 0.
    Returns (B, T//4, 2*hidden_dim) f32, matching the PyTorch module."""
    H = hidden_dim
    B, T, _ = x.shape

    # Pad batch to a sublane multiple of 8 (B is the MXU M-dim and the vreg
    # sublane dim of the recurrent state).  Padded rows are sliced off at the end.
    Bp = -(-B // 8) * 8
    if Bp != B:
        x = jnp.pad(x, ((0, Bp - B), (0, 0), (0, 0)))

    # ---- pBLSTM layer 1 ----
    p1 = params["layer1"]
    pre1 = _project_from_batch_first(x, p1["wih"], p1["b"], H)        # (2, T/2, Bp, 4H)
    hf1, hb1 = _bilstm_recurrence(pre1, p1["whh"].astype(jnp.bfloat16), H)
    T1 = T // 2
    hf1, hb1 = hf1[:T1], hb1[:T1]                                     # drop chunk padding

    # ---- pBLSTM layer 2 ----
    p2 = params["layer2"]
    pre2 = _project_from_dir_split(hf1, hb1, p2["wih"], p2["b"], H)   # (2, T/4, Bp, 4H)
    hf2, hb2 = _bilstm_recurrence(pre2, p2["whh"].astype(jnp.bfloat16), H)
    T2 = T // 4
    hf2, hb2 = hf2[:T2], hb2[:T2]

    # Single transpose back to batch-first + feature concat(fwd, bwd).
    out = jnp.concatenate([hf2, hb2], axis=-1)       # (T/4, Bp, 2H)
    out = jnp.transpose(out, (1, 0, 2))[:B]          # (B, T/4, 2H)
    return out.astype(jnp.float32)


# ----------------------------------------------------------------------------
# Deterministic parameter init (PyTorch LSTM-style uniform(-1/sqrt(H), 1/sqrt(H)))
# Weights stored pre-transposed and stacked per direction:
#   wih (2, In, 4H), whh (2, H, 4H), b (2, 4H) with b = b_ih + b_hh.
# ----------------------------------------------------------------------------
def _init_bilstm_params(key, in_dim, hidden_dim):
    H = hidden_dim
    bound = 1.0 / np.sqrt(H)
    keys = jax.random.split(key, 8)

    def u(k, shape):
        return jax.random.uniform(k, shape, jnp.float32, -bound, bound)

    return {
        "wih": jnp.stack([u(keys[0], (in_dim, 4 * H)),
                          u(keys[4], (in_dim, 4 * H))]),
        "whh": jnp.stack([u(keys[1], (H, 4 * H)),
                          u(keys[5], (H, 4 * H))]),
        "b": jnp.stack([u(keys[2], (4 * H,)) + u(keys[3], (4 * H,)),
                        u(keys[6], (4 * H,)) + u(keys[7], (4 * H,))]),
    }


def init_listener_params(key, input_feature_dim, hidden_dim):
    k1, k2 = jax.random.split(key)
    return {
        "layer1": _init_bilstm_params(k1, input_feature_dim * 2, hidden_dim),
        "layer2": _init_bilstm_params(k2, hidden_dim * 2 * 2, hidden_dim),
    }


# ----------------------------------------------------------------------------
# Pure-JAX f32 reference (lax.scan LSTM) for correctness checking.
# ----------------------------------------------------------------------------
def _ref_lstm_direction(x, w_ih, w_hh, b, H):
    B = x.shape[0]

    def step(carry, x_t):
        h, c = carry
        gates = x_t @ w_ih + h @ w_hh + b
        i_g = jax.nn.sigmoid(gates[:, :H])
        f_g = jax.nn.sigmoid(gates[:, H:2 * H])
        g_g = jnp.tanh(gates[:, 2 * H:3 * H])
        o_g = jax.nn.sigmoid(gates[:, 3 * H:])
        c = f_g * c + i_g * g_g
        h = o_g * jnp.tanh(c)
        return (h, c), h

    init = (jnp.zeros((B, H), jnp.float32), jnp.zeros((B, H), jnp.float32))
    _, hs = lax.scan(step, init, jnp.transpose(x, (1, 0, 2)))
    return jnp.transpose(hs, (1, 0, 2))


def _ref_pblstm(x, p, H):
    B, T, F = x.shape
    x = x.reshape(B, T // 2, F * 2)
    f = _ref_lstm_direction(x, p["wih"][0], p["whh"][0], p["b"][0], H)
    b = _ref_lstm_direction(x[:, ::-1, :], p["wih"][1], p["whh"][1],
                            p["b"][1], H)[:, ::-1, :]
    return jnp.concatenate([f, b], axis=-1)


def ref_listener_forward(x, params, H):
    out = _ref_pblstm(x, params["layer1"], H)
    out = _ref_pblstm(out, params["layer2"], H)
    return out


# ----------------------------------------------------------------------------
if __name__ == "__main__":
    B, T, D, H = 2, 8, 4, 32  # batch, seq len (multiple of 4), feature, hidden

    key = jax.random.PRNGKey(0)
    k_x, k_p = jax.random.split(key)
    x = jax.random.normal(k_x, (B, T, D), dtype=jnp.float32)
    params = init_listener_params(k_p, D, H)

    out = jax.block_until_ready(listener_forward(x, params, H))

    expected_shape = (B, T // 4, 2 * H)
    assert out.shape == expected_shape, (out.shape, expected_shape)

    ref = jax.block_until_ready(ref_listener_forward(x, params, H))
    # bf16 MXU path vs f32 reference: loosened tolerance (per review guidance).
    np.testing.assert_allclose(np.asarray(out), np.asarray(ref),
                               rtol=2e-2, atol=2e-2)

    print("KERNEL_OK")
</pallas_src>

<mosaic_0001>
module attributes {stable_mosaic.version = 11 : i64} {
  func.func @_bilstm_rec_kernel(%arg0: i32, %arg1: memref<1x4x8x128xbf16, #tpu.memory_space<vmem>>, %arg2: memref<1x4x8x128xbf16, #tpu.memory_space<vmem>>, %arg3: memref<2x32x128xbf16, #tpu.memory_space<vmem>>, %arg4: memref<4x8x32xbf16, #tpu.memory_space<vmem>>, %arg5: memref<4x8x32xbf16, #tpu.memory_space<vmem>>, %arg6: memref<8x32xf32, #tpu.memory_space<vmem>>, %arg7: memref<8x32xf32, #tpu.memory_space<vmem>>, %arg8: memref<8x32xf32, #tpu.memory_space<vmem>>, %arg9: memref<8x32xf32, #tpu.memory_space<vmem>>) attributes {dimension_semantics = [#tpu.dimension_semantics<arbitrary>], iteration_bounds = array<i64: 1>, scalar_prefetch = 0 : i64, scratch_operands = 4 : i64, tpu.core_type = #tpu.core_type<tc>, window_params = [{transform_indices = @transform_0, window_bounds = array<i64: 1, 4, 8, 128>}, {transform_indices = @transform_1, window_bounds = array<i64: 1, 4, 8, 128>}, {pipeline_mode = #tpu.pipeline_mode<synchronous>, transform_indices = @transform_2, window_bounds = array<i64: 2, 32, 128>}, {transform_indices = @transform_3, window_bounds = array<i64: 4, 8, 32>}, {transform_indices = @transform_4, window_bounds = array<i64: 4, 8, 32>}]} {
    %c0_i32 = arith.constant 0 : i32
    %0 = arith.cmpi eq, %arg0, %c0_i32 : i32
    %1 = arith.extui %0 : i1 to i32
    %c0_i32_0 = arith.constant 0 : i32
    %2 = arith.cmpi ne, %1, %c0_i32_0 : i32
    scf.if %2 {
      %cst_154 = arith.constant 0.000000e+00 : f32
      %319 = vector.broadcast %cst_154 : f32 to vector<8x32xf32>
      %c0_155 = arith.constant 0 : index
      %c0_156 = arith.constant 0 : index
      %320 = vector.load %arg6[%c0_155, %c0_156] : memref<8x32xf32, #tpu.memory_space<vmem>>, vector<8x32xf32>
      tpu.vector_store %arg6[%c0_155, %c0_156], %319 {strides = array<i32>} : memref<8x32xf32, #tpu.memory_space<vmem>>, vector<8x32xf32>,
      %cst_157 = arith.constant 0.000000e+00 : f32
      %321 = vector.broadcast %cst_157 : f32 to vector<8x32xf32>
      %c0_158 = arith.constant 0 : index
      %c0_159 = arith.constant 0 : index
      %322 = vector.load %arg7[%c0_158, %c0_159] : memref<8x32xf32, #tpu.memory_space<vmem>>, vector<8x32xf32>
      tpu.vector_store %arg7[%c0_158, %c0_159], %321 {strides = array<i32>} : memref<8x32xf32, #tpu.memory_space<vmem>>, vector<8x32xf32>,
      %cst_160 = arith.constant 0.000000e+00 : f32
      %323 = vector.broadcast %cst_160 : f32 to vector<8x32xf32>
      %c0_161 = arith.constant 0 : index
      %c0_162 = arith.constant 0 : index
      %324 = vector.load %arg8[%c0_161, %c0_162] : memref<8x32xf32, #tpu.memory_space<vmem>>, vector<8x32xf32>
      tpu.vector_store %arg8[%c0_161, %c0_162], %323 {strides = array<i32>} : memref<8x32xf32, #tpu.memory_space<vmem>>, vector<8x32xf32>,
      %cst_163 = arith.constant 0.000000e+00 : f32
      %325 = vector.broadcast %cst_163 : f32 to vector<8x32xf32>
      %c0_164 = arith.constant 0 : index
      %c0_165 = arith.constant 0 : index
      %326 = vector.load %arg9[%c0_164, %c0_165] : memref<8x32xf32, #tpu.memory_space<vmem>>, vector<8x32xf32>
      tpu.vector_store %arg9[%c0_164, %c0_165], %325 {strides = array<i32>} : memref<8x32xf32, #tpu.memory_space<vmem>>, vector<8x32xf32>,
    } else {
    }
    %c0 = arith.constant 0 : index
    %c0_1 = arith.constant 0 : index
    %c0_2 = arith.constant 0 : index
    %3 = vector.load %arg3[%c0, %c0_1, %c0_2] : memref<2x32x128xbf16, #tpu.memory_space<vmem>>, vector<1x32x128xbf16>
    %4 = vector.shape_cast %3 : vector<1x32x128xbf16> to vector<32x128xbf16>
    %c1 = arith.constant 1 : index
    %c0_3 = arith.constant 0 : index
    %c0_4 = arith.constant 0 : index
    %5 = vector.load %arg3[%c1, %c0_3, %c0_4] : memref<2x32x128xbf16, #tpu.memory_space<vmem>>, vector<1x32x128xbf16>
    %6 = vector.shape_cast %5 : vector<1x32x128xbf16> to vector<32x128xbf16>
    %c0_5 = arith.constant 0 : index
    %c0_6 = arith.constant 0 : index
    %c0_7 = arith.constant 0 : index
    %c0_8 = arith.constant 0 : index
    %7 = vector.load %arg1[%c0_5, %c0_6, %c0_7, %c0_8] : memref<1x4x8x128xbf16, #tpu.memory_space<vmem>>, vector<1x1x8x128xbf16>
    %8 = vector.shape_cast %7 : vector<1x1x8x128xbf16> to vector<8x128xbf16>
    %c0_9 = arith.constant 0 : index
    %c0_10 = arith.constant 0 : index
    %9 = vector.load %arg6[%c0_9, %c0_10] : memref<8x32xf32, #tpu.memory_space<vmem>>, vector<8x32xf32>
    %c0_11 = arith.constant 0 : index
    %c0_12 = arith.constant 0 : index
    %10 = vector.load %arg7[%c0_11, %c0_12] : memref<8x32xf32, #tpu.memory_space<vmem>>, vector<8x32xf32>
    %11 = arith.extf %8 : vector<8x128xbf16> to vector<8x128xf32>
    %12 = arith.truncf %9 : vector<8x32xf32> to vector<8x32xbf16>
    %cst = arith.constant dense<0.000000e+00> : vector<8x128xf32>
    %13 = tpu.matmul %12, %4, %cst {dimension_numbers = #tpu.dot_dimension_numbers<[1], [0], [0], [1], [0, 0, 1, 1], [], []>} : vector<8x32xbf16>, vector<32x128xbf16>, vector<8x128xf32> -> vector<8x128xf32>
    %14 = arith.addf %11, %13 : vector<8x128xf32>
    %15 = vector.extract_strided_slice %14 {offsets = [0, 0], sizes = [8, 32], strides = [1, 1]} : vector<8x128xf32> to vector<8x32xf32>
    %16 = arith.negf %15 : vector<8x32xf32>
    %17 = math.exp %16 : vector<8x32xf32>
    %cst_13 = arith.constant 1.000000e+00 : f32
    %18 = vector.broadcast %cst_13 : f32 to vector<8x32xf32>
    %19 = arith.addf %18, %17 : vector<8x32xf32>
    %20 = arith.divf %18, %19 : vector<8x32xf32>
    %21 = vector.extract_strided_slice %14 {offsets = [0, 32], sizes = [8, 32], strides = [1, 1]} : vector<8x128xf32> to vector<8x32xf32>
    %22 = arith.negf %21 : vector<8x32xf32>
    %23 = math.exp %22 : vector<8x32xf32>
    %cst_14 = arith.constant 1.000000e+00 : f32
    %24 = vector.broadcast %cst_14 : f32 to vector<8x32xf32>
    %25 = arith.addf %24, %23 : vector<8x32xf32>
    %26 = arith.divf %24, %25 : vector<8x32xf32>
    %27 = vector.extract_strided_slice %14 {offsets = [0, 64], sizes = [8, 32], strides = [1, 1]} : vector<8x128xf32> to vector<8x32xf32>
    %28 = math.tanh %27 : vector<8x32xf32>
    %29 = vector.extract_strided_slice %14 {offsets = [0, 96], sizes = [8, 32], strides = [1, 1]} : vector<8x128xf32> to vector<8x32xf32>
    %30 = arith.negf %29 : vector<8x32xf32>
    %31 = math.exp %30 : vector<8x32xf32>
    %cst_15 = arith.constant 1.000000e+00 : f32
    %32 = vector.broadcast %cst_15 : f32 to vector<8x32xf32>
    %33 = arith.addf %32, %31 : vector<8x32xf32>
    %34 = arith.divf %32, %33 : vector<8x32xf32>
    %35 = arith.mulf %26, %10 : vector<8x32xf32>
    %36 = arith.mulf %20, %28 : vector<8x32xf32>
    %37 = arith.addf %35, %36 : vector<8x32xf32>
    %38 = math.tanh %37 : vector<8x32xf32>
    %39 = arith.mulf %34, %38 : vector<8x32xf32>
    %c0_16 = arith.constant 0 : index
    %c3 = arith.constant 3 : index
    %c0_17 = arith.constant 0 : index
    %c0_18 = arith.constant 0 : index
    %40 = vector.load %arg2[%c0_16, %c3, %c0_17, %c0_18] : memref<1x4x8x128xbf16, #tpu.memory_space<vmem>>, vector<1x1x8x128xbf16>
    %41 = vector.shape_cast %40 : vector<1x1x8x128xbf16> to vector<8x128xbf16>
    %c0_19 = arith.constant 0 : index
    %c0_20 = arith.constant 0 : index
    %42 = vector.load %arg8[%c0_19, %c0_20] : memref<8x32xf32, #tpu.memory_space<vmem>>, vector<8x32xf32>
    %c0_21 = arith.constant 0 : index
    %c0_22 = arith.constant 0 : index
    %43 = vector.load %arg9[%c0_21, %c0_22] : memref<8x32xf32, #tpu.memory_space<vmem>>, vector<8x32xf32>
    %44 = arith.extf %41 : vector<8x128xbf16> to vector<8x128xf32>
    %45 = arith.truncf %42 : vector<8x32xf32> to vector<8x32xbf16>
    %cst_23 = arith.constant dense<0.000000e+00> : vector<8x128xf32>
    %46 = tpu.matmul %45, %6, %cst_23 {dimension_numbers = #tpu.dot_dimension_numbers<[1], [0], [0], [1], [0, 0, 1, 1], [], []>} : vector<8x32xbf16>, vector<32x128xbf16>, vector<8x128xf32> -> vector<8x128xf32>
    %47 = arith.addf %44, %46 : vector<8x128xf32>
    %48 = vector.extract_strided_slice %47 {offsets = [0, 0], sizes = [8, 32], strides = [1, 1]} : vector<8x128xf32> to vector<8x32xf32>
    %49 = arith.negf %48 : vector<8x32xf32>
    %50 = math.exp %49 : vector<8x32xf32>
    %cst_24 = arith.constant 1.000000e+00 : f32
    %51 = vector.broadcast %cst_24 : f32 to vector<8x32xf32>
    %52 = arith.addf %51, %50 : vector<8x32xf32>
    %53 = arith.divf %51, %52 : vector<8x32xf32>
    %54 = vector.extract_strided_slice %47 {offsets = [0, 32], sizes = [8, 32], strides = [1, 1]} : vector<8x128xf32> to vector<8x32xf32>
    %55 = arith.negf %54 : vector<8x32xf32>
    %56 = math.exp %55 : vector<8x32xf32>
    %cst_25 = arith.constant 1.000000e+00 : f32
    %57 = vector.broadcast %cst_25 : f32 to vector<8x32xf32>
    %58 = arith.addf %57, %56 : vector<8x32xf32>
    %59 = arith.divf %57, %58 : vector<8x32xf32>
    %60 = vector.extract_strided_slice %47 {offsets = [0, 64], sizes = [8, 32], strides = [1, 1]} : vector<8x128xf32> to vector<8x32xf32>
    %61 = math.tanh %60 : vector<8x32xf32>
    %62 = vector.extract_strided_slice %47 {offsets = [0, 96], sizes = [8, 32], strides = [1, 1]} : vector<8x128xf32> to vector<8x32xf32>
    %63 = arith.negf %62 : vector<8x32xf32>
    %64 = math.exp %63 : vector<8x32xf32>
    %cst_26 = arith.constant 1.000000e+00 : f32
    %65 = vector.broadcast %cst_26 : f32 to vector<8x32xf32>
    %66 = arith.addf %65, %64 : vector<8x32xf32>
    %67 = arith.divf %65, %66 : vector<8x32xf32>
    %68 = arith.mulf %59, %43 : vector<8x32xf32>
    %69 = arith.mulf %53, %61 : vector<8x32xf32>
    %70 = arith.addf %68, %69 : vector<8x32xf32>
    %71 = math.tanh %70 : vector<8x32xf32>
    %72 = arith.mulf %67, %71 : vector<8x32xf32>
    %c0_27 = arith.constant 0 : index
    %c0_28 = arith.constant 0 : index
    %73 = vector.load %arg6[%c0_27, %c0_28] : memref<8x32xf32, #tpu.memory_space<vmem>>, vector<8x32xf32>
    tpu.vector_store %arg6[%c0_27, %c0_28], %39 {strides = array<i32>} : memref<8x32xf32, #tpu.memory_space<vmem>>, vector<8x32xf32>,
    %c0_29 = arith.constant 0 : index
    %c0_30 = arith.constant 0 : index
    %74 = vector.load %arg7[%c0_29, %c0_30] : memref<8x32xf32, #tpu.memory_space<vmem>>, vector<8x32xf32>
    tpu.vector_store %arg7[%c0_29, %c0_30], %37 {strides = array<i32>} : memref<8x32xf32, #tpu.memory_space<vmem>>, vector<8x32xf32>,
    %c0_31 = arith.constant 0 : index
    %c0_32 = arith.constant 0 : index
    %75 = vector.load %arg8[%c0_31, %c0_32] : memref<8x32xf32, #tpu.memory_space<vmem>>, vector<8x32xf32>
    tpu.vector_store %arg8[%c0_31, %c0_32], %72 {strides = array<i32>} : memref<8x32xf32, #tpu.memory_space<vmem>>, vector<8x32xf32>,
    %c0_33 = arith.constant 0 : index
    %c0_34 = arith.constant 0 : index
    %76 = vector.load %arg9[%c0_33, %c0_34] : memref<8x32xf32, #tpu.memory_space<vmem>>, vector<8x32xf32>
    tpu.vector_store %arg9[%c0_33, %c0_34], %70 {strides = array<i32>} : memref<8x32xf32, #tpu.memory_space<vmem>>, vector<8x32xf32>,
    %77 = arith.truncf %39 : vector<8x32xf32> to vector<8x32xbf16>
    %c0_35 = arith.constant 0 : index
    %c0_36 = arith.constant 0 : index
    %c0_37 = arith.constant 0 : index
    %78 = vector.load %arg4[%c0_35, %c0_36, %c0_37] : memref<4x8x32xbf16, #tpu.memory_space<vmem>>, vector<1x8x32xbf16>
    %79 = vector.shape_cast %78 : vector<1x8x32xbf16> to vector<8x32xbf16>
    %80 = vector.shape_cast %77 : vector<8x32xbf16> to vector<1x8x32xbf16>
    tpu.vector_store %arg4[%c0_35, %c0_36, %c0_37], %80 {strides = array<i32>} : memref<4x8x32xbf16, #tpu.memory_space<vmem>>, vector<1x8x32xbf16>,
    %81 = arith.truncf %72 : vector<8x32xf32> to vector<8x32xbf16>
    %c3_38 = arith.constant 3 : index
    %c0_39 = arith.constant 0 : index
    %c0_40 = arith.constant 0 : index
    %82 = vector.load %arg5[%c3_38, %c0_39, %c0_40] : memref<4x8x32xbf16, #tpu.memory_space<vmem>>, vector<1x8x32xbf16>
    %83 = vector.shape_cast %82 : vector<1x8x32xbf16> to vector<8x32xbf16>
    %84 = vector.shape_cast %81 : vector<8x32xbf16> to vector<1x8x32xbf16>
    tpu.vector_store %arg5[%c3_38, %c0_39, %c0_40], %84 {strides = array<i32>} : memref<4x8x32xbf16, #tpu.memory_space<vmem>>, vector<1x8x32xbf16>,
    %c0_41 = arith.constant 0 : index
    %c1_42 = arith.constant 1 : index
    %c0_43 = arith.constant 0 : index
    %c0_44 = arith.constant 0 : index
    %85 = vector.load %arg1[%c0_41, %c1_42, %c0_43, %c0_44] : memref<1x4x8x128xbf16, #tpu.memory_space<vmem>>, vector<1x1x8x128xbf16>
    %86 = vector.shape_cast %85 : vector<1x1x8x128xbf16> to vector<8x128xbf16>
    %c0_45 = arith.constant 0 : index
    %c0_46 = arith.constant 0 : index
    %87 = vector.load %arg6[%c0_45, %c0_46] : memref<8x32xf32, #tpu.memory_space<vmem>>, vector<8x32xf32>
    %c0_47 = arith.constant 0 : index
    %c0_48 = arith.constant 0 : index
    %88 = vector.load %arg7[%c0_47, %c0_48] : memref<8x32xf32, #tpu.memory_space<vmem>>, vector<8x32xf32>
    %89 = arith.extf %86 : vector<8x128xbf16> to vector<8x128xf32>
    %90 = arith.truncf %87 : vector<8x32xf32> to vector<8x32xbf16>
    %cst_49 = arith.constant dense<0.000000e+00> : vector<8x128xf32>
    %91 = tpu.matmul %90, %4, %cst_49 {dimension_numbers = #tpu.dot_dimension_numbers<[1], [0], [0], [1], [0, 0, 1, 1], [], []>} : vector<8x32xbf16>, vector<32x128xbf16>, vector<8x128xf32> -> vector<8x128xf32>
    %92 = arith.addf %89, %91 : vector<8x128xf32>
    %93 = vector.extract_strided_slice %92 {offsets = [0, 0], sizes = [8, 32], strides = [1, 1]} : vector<8x128xf32> to vector<8x32xf32>
    %94 = arith.negf %93 : vector<8x32xf32>
    %95 = math.exp %94 : vector<8x32xf32>
    %cst_50 = arith.constant 1.000000e+00 : f32
    %96 = vector.broadcast %cst_50 : f32 to vector<8x32xf32>
    %97 = arith.addf %96, %95 : vector<8x32xf32>
    %98 = arith.divf %96, %97 : vector<8x32xf32>
    %99 = vector.extract_strided_slice %92 {offsets = [0, 32], sizes = [8, 32], strides = [1, 1]} : vector<8x128xf32> to vector<8x32xf32>
    %100 = arith.negf %99 : vector<8x32xf32>
    %101 = math.exp %100 : vector<8x32xf32>
    %cst_51 = arith.constant 1.000000e+00 : f32
    %102 = vector.broadcast %cst_51 : f32 to vector<8x32xf32>
    %103 = arith.addf %102, %101 : vector<8x32xf32>
    %104 = arith.divf %102, %103 : vector<8x32xf32>
    %105 = vector.extract_strided_slice %92 {offsets = [0, 64], sizes = [8, 32], strides = [1, 1]} : vector<8x128xf32> to vector<8x32xf32>
    %106 = math.tanh %105 : vector<8x32xf32>
    %107 = vector.extract_strided_slice %92 {offsets = [0, 96], sizes = [8, 32], strides = [1, 1]} : vector<8x128xf32> to vector<8x32xf32>
    %108 = arith.negf %107 : vector<8x32xf32>
    %109 = math.exp %108 : vector<8x32xf32>
    %cst_52 = arith.constant 1.000000e+00 : f32
    %110 = vector.broadcast %cst_52 : f32 to vector<8x32xf32>
    %111 = arith.addf %110, %109 : vector<8x32xf32>
    %112 = arith.divf %110, %111 : vector<8x32xf32>
    %113 = arith.mulf %104, %88 : vector<8x32xf32>
    %114 = arith.mulf %98, %106 : vector<8x32xf32>
    %115 = arith.addf %113, %114 : vector<8x32xf32>
    %116 = math.tanh %115 : vector<8x32xf32>
    %117 = arith.mulf %112, %116 : vector<8x32xf32>
    %c0_53 = arith.constant 0 : index
    %c2 = arith.constant 2 : index
    %c0_54 = arith.constant 0 : index
    %c0_55 = arith.constant 0 : index
    %118 = vector.load %arg2[%c0_53, %c2, %c0_54, %c0_55] : memref<1x4x8x128xbf16, #tpu.memory_space<vmem>>, vector<1x1x8x128xbf16>
    %119 = vector.shape_cast %118 : vector<1x1x8x128xbf16> to vector<8x128xbf16>
    %c0_56 = arith.constant 0 : index
    %c0_57 = arith.constant 0 : index
    %120 = vector.load %arg8[%c0_56, %c0_57] : memref<8x32xf32, #tpu.memory_space<vmem>>, vector<8x32xf32>
    %c0_58 = arith.constant 0 : index
    %c0_59 = arith.constant 0 : index
    %121 = vector.load %arg9[%c0_58, %c0_59] : memref<8x32xf32, #tpu.memory_space<vmem>>, vector<8x32xf32>
    %122 = arith.extf %119 : vector<8x128xbf16> to vector<8x128xf32>
    %123 = arith.truncf %120 : vector<8x32xf32> to vector<8x32xbf16>
    %cst_60 = arith.constant dense<0.000000e+00> : vector<8x128xf32>
    %124 = tpu.matmul %123, %6, %cst_60 {dimension_numbers = #tpu.dot_dimension_numbers<[1], [0], [0], [1], [0, 0, 1, 1], [], []>} : vector<8x32xbf16>, vector<32x128xbf16>, vector<8x128xf32> -> vector<8x128xf32>
    %125 = arith.addf %122, %124 : vector<8x128xf32>
    %126 = vector.extract_strided_slice %125 {offsets = [0, 0], sizes = [8, 32], strides = [1, 1]} : vector<8x128xf32> to vector<8x32xf32>
    %127 = arith.negf %126 : vector<8x32xf32>
    %128 = math.exp %127 : vector<8x32xf32>
    %cst_61 = arith.constant 1.000000e+00 : f32
    %129 = vector.broadcast %cst_61 : f32 to vector<8x32xf32>
    %130 = arith.addf %129, %128 : vector<8x32xf32>
    %131 = arith.divf %129, %130 : vector<8x32xf32>
    %132 = vector.extract_strided_slice %125 {offsets = [0, 32], sizes = [8, 32], strides = [1, 1]} : vector<8x128xf32> to vector<8x32xf32>
    %133 = arith.negf %132 : vector<8x32xf32>
    %134 = math.exp %133 : vector<8x32xf32>
    %cst_62 = arith.constant 1.000000e+00 : f32
    %135 = vector.broadcast %cst_62 : f32 to vector<8x32xf32>
    %136 = arith.addf %135, %134 : vector<8x32xf32>
    %137 = arith.divf %135, %136 : vector<8x32xf32>
    %138 = vector.extract_strided_slice %125 {offsets = [0, 64], sizes = [8, 32], strides = [1, 1]} : vector<8x128xf32> to vector<8x32xf32>
    %139 = math.tanh %138 : vector<8x32xf32>
    %140 = vector.extract_strided_slice %125 {offsets = [0, 96], sizes = [8, 32], strides = [1, 1]} : vector<8x128xf32> to vector<8x32xf32>
    %141 = arith.negf %140 : vector<8x32xf32>
    %142 = math.exp %141 : vector<8x32xf32>
    %cst_63 = arith.constant 1.000000e+00 : f32
    %143 = vector.broadcast %cst_63 : f32 to vector<8x32xf32>
    %144 = arith.addf %143, %142 : vector<8x32xf32>
    %145 = arith.divf %143, %144 : vector<8x32xf32>
    %146 = arith.mulf %137, %121 : vector<8x32xf32>
    %147 = arith.mulf %131, %139 : vector<8x32xf32>
    %148 = arith.addf %146, %147 : vector<8x32xf32>
    %149 = math.tanh %148 : vector<8x32xf32>
    %150 = arith.mulf %145, %149 : vector<8x32xf32>
    %c0_64 = arith.constant 0 : index
    %c0_65 = arith.constant 0 : index
    %151 = vector.load %arg6[%c0_64, %c0_65] : memref<8x32xf32, #tpu.memory_space<vmem>>, vector<8x32xf32>
    tpu.vector_store %arg6[%c0_64, %c0_65], %117 {strides = array<i32>} : memref<8x32xf32, #tpu.memory_space<vmem>>, vector<8x32xf32>,
    %c0_66 = arith.constant 0 : index
    %c0_67 = arith.constant 0 : index
    %152 = vector.load %arg7[%c0_66, %c0_67] : memref<8x32xf32, #tpu.memory_space<vmem>>, vector<8x32xf32>
    tpu.vector_store %arg7[%c0_66, %c0_67], %115 {strides = array<i32>} : memref<8x32xf32, #tpu.memory_space<vmem>>, vector<8x32xf32>,
    %c0_68 = arith.constant 0 : index
    %c0_69 = arith.constant 0 : index
    %153 = vector.load %arg8[%c0_68, %c0_69] : memref<8x32xf32, #tpu.memory_space<vmem>>, vector<8x32xf32>
    tpu.vector_store %arg8[%c0_68, %c0_69], %150 {strides = array<i32>} : memref<8x32xf32, #tpu.memory_space<vmem>>, vector<8x32xf32>,
    %c0_70 = arith.constant 0 : index
    %c0_71 = arith.constant 0 : index
    %154 = vector.load %arg9[%c0_70, %c0_71] : memref<8x32xf32, #tpu.memory_space<vmem>>, vector<8x32xf32>
    tpu.vector_store %arg9[%c0_70, %c0_71], %148 {strides = array<i32>} : memref<8x32xf32, #tpu.memory_space<vmem>>, vector<8x32xf32>,
    %155 = arith.truncf %117 : vector<8x32xf32> to vector<8x32xbf16>
    %c1_72 = arith.constant 1 : index
    %c0_73 = arith.constant 0 : index
    %c0_74 = arith.constant 0 : index
    %156 = vector.load %arg4[%c1_72, %c0_73, %c0_74] : memref<4x8x32xbf16, #tpu.memory_space<vmem>>, vector<1x8x32xbf16>
    %157 = vector.shape_cast %156 : vector<1x8x32xbf16> to vector<8x32xbf16>
    %158 = vector.shape_cast %155 : vector<8x32xbf16> to vector<1x8x32xbf16>
    tpu.vector_store %arg4[%c1_72, %c0_73, %c0_74], %158 {strides = array<i32>} : memref<4x8x32xbf16, #tpu.memory_space<vmem>>, vector<1x8x32xbf16>,
    %159 = arith.truncf %150 : vector<8x32xf32> to vector<8x32xbf16>
    %c2_75 = arith.constant 2 : index
    %c0_76 = arith.constant 0 : index
    %c0_77 = arith.constant 0 : index
    %160 = vector.load %arg5[%c2_75, %c0_76, %c0_77] : memref<4x8x32xbf16, #tpu.memory_space<vmem>>, vector<1x8x32xbf16>
    %161 = vector.shape_cast %160 : vector<1x8x32xbf16> to vector<8x32xbf16>
    %162 = vector.shape_cast %159 : vector<8x32xbf16> to vector<1x8x32xbf16>
    tpu.vector_store %arg5[%c2_75, %c0_76, %c0_77], %162 {strides = array<i32>} : memref<4x8x32xbf16, #tpu.memory_space<vmem>>, vector<1x8x32xbf16>,
    %c0_78 = arith.constant 0 : index
    %c2_79 = arith.constant 2 : index
    %c0_80 = arith.constant 0 : index
    %c0_81 = arith.constant 0 : index
    %163 = vector.load %arg1[%c0_78, %c2_79, %c0_80, %c0_81] : memref<1x4x8x128xbf16, #tpu.memory_space<vmem>>, vector<1x1x8x128xbf16>
    %164 = vector.shape_cast %163 : vector<1x1x8x128xbf16> to vector<8x128xbf16>
    %c0_82 = arith.constant 0 : index
    %c0_83 = arith.constant 0 : index
    %165 = vector.load %arg6[%c0_82, %c0_83] : memref<8x32xf32, #tpu.memory_space<vmem>>, vector<8x32xf32>
    %c0_84 = arith.constant 0 : index
    %c0_85 = arith.constant 0 : index
    %166 = vector.load %arg7[%c0_84, %c0_85] : memref<8x32xf32, #tpu.memory_space<vmem>>, vector<8x32xf32>
    %167 = arith.extf %164 : vector<8x128xbf16> to vector<8x128xf32>
    %168 = arith.truncf %165 : vector<8x32xf32> to vector<8x32xbf16>
    %cst_86 = arith.constant dense<0.000000e+00> : vector<8x128xf32>
    %169 = tpu.matmul %168, %4, %cst_86 {dimension_numbers = #tpu.dot_dimension_numbers<[1], [0], [0], [1], [0, 0, 1, 1], [], []>} : vector<8x32xbf16>, vector<32x128xbf16>, vector<8x128xf32> -> vector<8x128xf32>
    %170 = arith.addf %167, %169 : vector<8x128xf32>
    %171 = vector.extract_strided_slice %170 {offsets = [0, 0], sizes = [8, 32], strides = [1, 1]} : vector<8x128xf32> to vector<8x32xf32>
    %172 = arith.negf %171 : vector<8x32xf32>
    %173 = math.exp %172 : vector<8x32xf32>
    %cst_87 = arith.constant 1.000000e+00 : f32
    %174 = vector.broadcast %cst_87 : f32 to vector<8x32xf32>
    %175 = arith.addf %174, %173 : vector<8x32xf32>
    %176 = arith.divf %174, %175 : vector<8x32xf32>
    %177 = vector.extract_strided_slice %170 {offsets = [0, 32], sizes = [8, 32], strides = [1, 1]} : vector<8x128xf32> to vector<8x32xf32>
    %178 = arith.negf %177 : vector<8x32xf32>
    %179 = math.exp %178 : vector<8x32xf32>
    %cst_88 = arith.constant 1.000000e+00 : f32
    %180 = vector.broadcast %cst_88 : f32 to vector<8x32xf32>
    %181 = arith.addf %180, %179 : vector<8x32xf32>
    %182 = arith.divf %180, %181 : vector<8x32xf32>
    %183 = vector.extract_strided_slice %170 {offsets = [0, 64], sizes = [8, 32], strides = [1, 1]} : vector<8x128xf32> to vector<8x32xf32>
    %184 = math.tanh %183 : vector<8x32xf32>
    %185 = vector.extract_strided_slice %170 {offsets = [0, 96], sizes = [8, 32], strides = [1, 1]} : vector<8x128xf32> to vector<8x32xf32>
    %186 = arith.negf %185 : vector<8x32xf32>
    %187 = math.exp %186 : vector<8x32xf32>
    %cst_89 = arith.constant 1.000000e+00 : f32
    %188 = vector.broadcast %cst_89 : f32 to vector<8x32xf32>
    %189 = arith.addf %188, %187 : vector<8x32xf32>
    %190 = arith.divf %188, %189 : vector<8x32xf32>
    %191 = arith.mulf %182, %166 : vector<8x32xf32>
    %192 = arith.mulf %176, %184 : vector<8x32xf32>
    %193 = arith.addf %191, %192 : vector<8x32xf32>
    %194 = math.tanh %193 : vector<8x32xf32>
    %195 = arith.mulf %190, %194 : vector<8x32xf32>
    %c0_90 = arith.constant 0 : index
    %c1_91 = arith.constant 1 : index
    %c0_92 = arith.constant 0 : index
    %c0_93 = arith.constant 0 : index
    %196 = vector.load %arg2[%c0_90, %c1_91, %c0_92, %c0_93] : memref<1x4x8x128xbf16, #tpu.memory_space<vmem>>, vector<1x1x8x128xbf16>
    %197 = vector.shape_cast %196 : vector<1x1x8x128xbf16> to vector<8x128xbf16>
    %c0_94 = arith.constant 0 : index
    %c0_95 = arith.constant 0 : index
    %198 = vector.load %arg8[%c0_94, %c0_95] : memref<8x32xf32, #tpu.memory_space<vmem>>, vector<8x32xf32>
    %c0_96 = arith.constant 0 : index
    %c0_97 = arith.constant 0 : index
    %199 = vector.load %arg9[%c0_96, %c0_97] : memref<8x32xf32, #tpu.memory_space<vmem>>, vector<8x32xf32>
    %200 = arith.extf %197 : vector<8x128xbf16> to vector<8x128xf32>
    %201 = arith.truncf %198 : vector<8x32xf32> to vector<8x32xbf16>
    %cst_98 = arith.constant dense<0.000000e+00> : vector<8x128xf32>
    %202 = tpu.matmul %201, %6, %cst_98 {dimension_numbers = #tpu.dot_dimension_numbers<[1], [0], [0], [1], [0, 0, 1, 1], [], []>} : vector<8x32xbf16>, vector<32x128xbf16>, vector<8x128xf32> -> vector<8x128xf32>
    %203 = arith.addf %200, %202 : vector<8x128xf32>
    %204 = vector.extract_strided_slice %203 {offsets = [0, 0], sizes = [8, 32], strides = [1, 1]} : vector<8x128xf32> to vector<8x32xf32>
    %205 = arith.negf %204 : vector<8x32xf32>
    %206 = math.exp %205 : vector<8x32xf32>
    %cst_99 = arith.constant 1.000000e+00 : f32
    %207 = vector.broadcast %cst_99 : f32 to vector<8x32xf32>
    %208 = arith.addf %207, %206 : vector<8x32xf32>
    %209 = arith.divf %207, %208 : vector<8x32xf32>
    %210 = vector.extract_strided_slice %203 {offsets = [0, 32], sizes = [8, 32], strides = [1, 1]} : vector<8x128xf32> to vector<8x32xf32>
    %211 = arith.negf %210 : vector<8x32xf32>
    %212 = math.exp %211 : vector<8x32xf32>
    %cst_100 = arith.constant 1.000000e+00 : f32
    %213 = vector.broadcast %cst_100 : f32 to vector<8x32xf32>
    %214 = arith.addf %213, %212 : vector<8x32xf32>
    %215 = arith.divf %213, %214 : vector<8x32xf32>
    %216 = vector.extract_strided_slice %203 {offsets = [0, 64], sizes = [8, 32], strides = [1, 1]} : vector<8x128xf32> to vector<8x32xf32>
    %217 = math.tanh %216 : vector<8x32xf32>
    %218 = vector.extract_strided_slice %203 {offsets = [0, 96], sizes = [8, 32], strides = [1, 1]} : vector<8x128xf32> to vector<8x32xf32>
    %219 = arith.negf %218 : vector<8x32xf32>
    %220 = math.exp %219 : vector<8x32xf32>
    %cst_101 = arith.constant 1.000000e+00 : f32
    %221 = vector.broadcast %cst_101 : f32 to vector<8x32xf32>
    %222 = arith.addf %221, %220 : vector<8x32xf32>
    %223 = arith.divf %221, %222 : vector<8x32xf32>
    %224 = arith.mulf %215, %199 : vector<8x32xf32>
    %225 = arith.mulf %209, %217 : vector<8x32xf32>
    %226 = arith.addf %224, %225 : vector<8x32xf32>
    %227 = math.tanh %226 : vector<8x32xf32>
    %228 = arith.mulf %223, %227 : vector<8x32xf32>
    %c0_102 = arith.constant 0 : index
    %c0_103 = arith.constant 0 : index
    %229 = vector.load %arg6[%c0_102, %c0_103] : memref<8x32xf32, #tpu.memory_space<vmem>>, vector<8x32xf32>
    tpu.vector_store %arg6[%c0_102, %c0_103], %195 {strides = array<i32>} : memref<8x32xf32, #tpu.memory_space<vmem>>, vector<8x32xf32>,
    %c0_104 = arith.constant 0 : index
    %c0_105 = arith.constant 0 : index
    %230 = vector.load %arg7[%c0_104, %c0_105] : memref<8x32xf32, #tpu.memory_space<vmem>>, vector<8x32xf32>
    tpu.vector_store %arg7[%c0_104, %c0_105], %193 {strides = array<i32>} : memref<8x32xf32, #tpu.memory_space<vmem>>, vector<8x32xf32>,
    %c0_106 = arith.constant 0 : index
    %c0_107 = arith.constant 0 : index
    %231 = vector.load %arg8[%c0_106, %c0_107] : memref<8x32xf32, #tpu.memory_space<vmem>>, vector<8x32xf32>
    tpu.vector_store %arg8[%c0_106, %c0_107], %228 {strides = array<i32>} : memref<8x32xf32, #tpu.memory_space<vmem>>, vector<8x32xf32>,
    %c0_108 = arith.constant 0 : index
    %c0_109 = arith.constant 0 : index
    %232 = vector.load %arg9[%c0_108, %c0_109] : memref<8x32xf32, #tpu.memory_space<vmem>>, vector<8x32xf32>
    tpu.vector_store %arg9[%c0_108, %c0_109], %226 {strides = array<i32>} : memref<8x32xf32, #tpu.memory_space<vmem>>, vector<8x32xf32>,
    %233 = arith.truncf %195 : vector<8x32xf32> to vector<8x32xbf16>
    %c2_110 = arith.constant 2 : index
    %c0_111 = arith.constant 0 : index
    %c0_112 = arith.constant 0 : index
    %234 = vector.load %arg4[%c2_110, %c0_111, %c0_112] : memref<4x8x32xbf16, #tpu.memory_space<vmem>>, vector<1x8x32xbf16>
    %235 = vector.shape_cast %234 : vector<1x8x32xbf16> to vector<8x32xbf16>
    %236 = vector.shape_cast %233 : vector<8x32xbf16> to vector<1x8x32xbf16>
    tpu.vector_store %arg4[%c2_110, %c0_111, %c0_112], %236 {strides = array<i32>} : memref<4x8x32xbf16, #tpu.memory_space<vmem>>, vector<1x8x32xbf16>,
    %237 = arith.truncf %228 : vector<8x32xf32> to vector<8x32xbf16>
    %c1_113 = arith.constant 1 : index
    %c0_114 = arith.constant 0 : index
    %c0_115 = arith.constant 0 : index
    %238 = vector.load %arg5[%c1_113, %c0_114, %c0_115] : memref<4x8x32xbf16, #tpu.memory_space<vmem>>, vector<1x8x32xbf16>
    %239 = vector.shape_cast %238 : vector<1x8x32xbf16> to vector<8x32xbf16>
    %240 = vector.shape_cast %237 : vector<8x32xbf16> to vector<1x8x32xbf16>
    tpu.vector_store %arg5[%c1_113, %c0_114, %c0_115], %240 {strides = array<i32>} : memref<4x8x32xbf16, #tpu.memory_space<vmem>>, vector<1x8x32xbf16>,
    %c0_116 = arith.constant 0 : index
    %c3_117 = arith.constant 3 : index
    %c0_118 = arith.constant 0 : index
    %c0_119 = arith.constant 0 : index
    %241 = vector.load %arg1[%c0_116, %c3_117, %c0_118, %c0_119] : memref<1x4x8x128xbf16, #tpu.memory_space<vmem>>, vector<1x1x8x128xbf16>
    %242 = vector.shape_cast %241 : vector<1x1x8x128xbf16> to vector<8x128xbf16>
    %c0_120 = arith.constant 0 : index
    %c0_121 = arith.constant 0 : index
    %243 = vector.load %arg6[%c0_120, %c0_121] : memref<8x32xf32, #tpu.memory_space<vmem>>, vector<8x32xf32>
    %c0_122 = arith.constant 0 : index
    %c0_123 = arith.constant 0 : index
    %244 = vector.load %arg7[%c0_122, %c0_123] : memref<8x32xf32, #tpu.memory_space<vmem>>, vector<8x32xf32>
    %245 = arith.extf %242 : vector<8x128xbf16> to vector<8x128xf32>
    %246 = arith.truncf %243 : vector<8x32xf32> to vector<8x32xbf16>
    %cst_124 = arith.constant dense<0.000000e+00> : vector<8x128xf32>
    %247 = tpu.matmul %246, %4, %cst_124 {dimension_numbers = #tpu.dot_dimension_numbers<[1], [0], [0], [1], [0, 0, 1, 1], [], []>} : vector<8x32xbf16>, vector<32x128xbf16>, vector<8x128xf32> -> vector<8x128xf32>
    %248 = arith.addf %245, %247 : vector<8x128xf32>
    %249 = vector.extract_strided_slice %248 {offsets = [0, 0], sizes = [8, 32], strides = [1, 1]} : vector<8x128xf32> to vector<8x32xf32>
    %250 = arith.negf %249 : vector<8x32xf32>
    %251 = math.exp %250 : vector<8x32xf32>
    %cst_125 = arith.constant 1.000000e+00 : f32
    %252 = vector.broadcast %cst_125 : f32 to vector<8x32xf32>
    %253 = arith.addf %252, %251 : vector<8x32xf32>
    %254 = arith.divf %252, %253 : vector<8x32xf32>
    %255 = vector.extract_strided_slice %248 {offsets = [0, 32], sizes = [8, 32], strides = [1, 1]} : vector<8x128xf32> to vector<8x32xf32>
    %256 = arith.negf %255 : vector<8x32xf32>
    %257 = math.exp %256 : vector<8x32xf32>
    %cst_126 = arith.constant 1.000000e+00 : f32
    %258 = vector.broadcast %cst_126 : f32 to vector<8x32xf32>
    %259 = arith.addf %258, %257 : vector<8x32xf32>
    %260 = arith.divf %258, %259 : vector<8x32xf32>
    %261 = vector.extract_strided_slice %248 {offsets = [0, 64], sizes = [8, 32], strides = [1, 1]} : vector<8x128xf32> to vector<8x32xf32>
    %262 = math.tanh %261 : vector<8x32xf32>
    %263 = vector.extract_strided_slice %248 {offsets = [0, 96], sizes = [8, 32], strides = [1, 1]} : vector<8x128xf32> to vector<8x32xf32>
    %264 = arith.negf %263 : vector<8x32xf32>
    %265 = math.exp %264 : vector<8x32xf32>
    %cst_127 = arith.constant 1.000000e+00 : f32
    %266 = vector.broadcast %cst_127 : f32 to vector<8x32xf32>
    %267 = arith.addf %266, %265 : vector<8x32xf32>
    %268 = arith.divf %266, %267 : vector<8x32xf32>
    %269 = arith.mulf %260, %244 : vector<8x32xf32>
    %270 = arith.mulf %254, %262 : vector<8x32xf32>
    %271 = arith.addf %269, %270 : vector<8x32xf32>
    %272 = math.tanh %271 : vector<8x32xf32>
    %273 = arith.mulf %268, %272 : vector<8x32xf32>
    %c0_128 = arith.constant 0 : index
    %c0_129 = arith.constant 0 : index
    %c0_130 = arith.constant 0 : index
    %c0_131 = arith.constant 0 : index
    %274 = vector.load %arg2[%c0_128, %c0_129, %c0_130, %c0_131] : memref<1x4x8x128xbf16, #tpu.memory_space<vmem>>, vector<1x1x8x128xbf16>
    %275 = vector.shape_cast %274 : vector<1x1x8x128xbf16> to vector<8x128xbf16>
    %c0_132 = arith.constant 0 : index
    %c0_133 = arith.constant 0 : index
    %276 = vector.load %arg8[%c0_132, %c0_133] : memref<8x32xf32, #tpu.memory_space<vmem>>, vector<8x32xf32>
    %c0_134 = arith.constant 0 : index
    %c0_135 = arith.constant 0 : index
    %277 = vector.load %arg9[%c0_134, %c0_135] : memref<8x32xf32, #tpu.memory_space<vmem>>, vector<8x32xf32>
    %278 = arith.extf %275 : vector<8x128xbf16> to vector<8x128xf32>
    %279 = arith.truncf %276 : vector<8x32xf32> to vector<8x32xbf16>
    %cst_136 = arith.constant dense<0.000000e+00> : vector<8x128xf32>
    %280 = tpu.matmul %279, %6, %cst_136 {dimension_numbers = #tpu.dot_dimension_numbers<[1], [0], [0], [1], [0, 0, 1, 1], [], []>} : vector<8x32xbf16>, vector<32x128xbf16>, vector<8x128xf32> -> vector<8x128xf32>
    %281 = arith.addf %278, %280 : vector<8x128xf32>
    %282 = vector.extract_strided_slice %281 {offsets = [0, 0], sizes = [8, 32], strides = [1, 1]} : vector<8x128xf32> to vector<8x32xf32>
    %283 = arith.negf %282 : vector<8x32xf32>
    %284 = math.exp %283 : vector<8x32xf32>
    %cst_137 = arith.constant 1.000000e+00 : f32
    %285 = vector.broadcast %cst_137 : f32 to vector<8x32xf32>
    %286 = arith.addf %285, %284 : vector<8x32xf32>
    %287 = arith.divf %285, %286 : vector<8x32xf32>
    %288 = vector.extract_strided_slice %281 {offsets = [0, 32], sizes = [8, 32], strides = [1, 1]} : vector<8x128xf32> to vector<8x32xf32>
    %289 = arith.negf %288 : vector<8x32xf32>
    %290 = math.exp %289 : vector<8x32xf32>
    %cst_138 = arith.constant 1.000000e+00 : f32
    %291 = vector.broadcast %cst_138 : f32 to vector<8x32xf32>
    %292 = arith.addf %291, %290 : vector<8x32xf32>
    %293 = arith.divf %291, %292 : vector<8x32xf32>
    %294 = vector.extract_strided_slice %281 {offsets = [0, 64], sizes = [8, 32], strides = [1, 1]} : vector<8x128xf32> to vector<8x32xf32>
    %295 = math.tanh %294 : vector<8x32xf32>
    %296 = vector.extract_strided_slice %281 {offsets = [0, 96], sizes = [8, 32], strides = [1, 1]} : vector<8x128xf32> to vector<8x32xf32>
    %297 = arith.negf %296 : vector<8x32xf32>
    %298 = math.exp %297 : vector<8x32xf32>
    %cst_139 = arith.constant 1.000000e+00 : f32
    %299 = vector.broadcast %cst_139 : f32 to vector<8x32xf32>
    %300 = arith.addf %299, %298 : vector<8x32xf32>
    %301 = arith.divf %299, %300 : vector<8x32xf32>
    %302 = arith.mulf %293, %277 : vector<8x32xf32>
    %303 = arith.mulf %287, %295 : vector<8x32xf32>
    %304 = arith.addf %302, %303 : vector<8x32xf32>
    %305 = math.tanh %304 : vector<8x32xf32>
    %306 = arith.mulf %301, %305 : vector<8x32xf32>
    %c0_140 = arith.constant 0 : index
    %c0_141 = arith.constant 0 : index
    %307 = vector.load %arg6[%c0_140, %c0_141] : memref<8x32xf32, #tpu.memory_space<vmem>>, vector<8x32xf32>
    tpu.vector_store %arg6[%c0_140, %c0_141], %273 {strides = array<i32>} : memref<8x32xf32, #tpu.memory_space<vmem>>, vector<8x32xf32>,
    %c0_142 = arith.constant 0 : index
    %c0_143 = arith.constant 0 : index
    %308 = vector.load %arg7[%c0_142, %c0_143] : memref<8x32xf32, #tpu.memory_space<vmem>>, vector<8x32xf32>
    tpu.vector_store %arg7[%c0_142, %c0_143], %271 {strides = array<i32>} : memref<8x32xf32, #tpu.memory_space<vmem>>, vector<8x32xf32>,
    %c0_144 = arith.constant 0 : index
    %c0_145 = arith.constant 0 : index
    %309 = vector.load %arg8[%c0_144, %c0_145] : memref<8x32xf32, #tpu.memory_space<vmem>>, vector<8x32xf32>
    tpu.vector_store %arg8[%c0_144, %c0_145], %306 {strides = array<i32>} : memref<8x32xf32, #tpu.memory_space<vmem>>, vector<8x32xf32>,
    %c0_146 = arith.constant 0 : index
    %c0_147 = arith.constant 0 : index
    %310 = vector.load %arg9[%c0_146, %c0_147] : memref<8x32xf32, #tpu.memory_space<vmem>>, vector<8x32xf32>
    tpu.vector_store %arg9[%c0_146, %c0_147], %304 {strides = array<i32>} : memref<8x32xf32, #tpu.memory_space<vmem>>, vector<8x32xf32>,
    %311 = arith.truncf %273 : vector<8x32xf32> to vector<8x32xbf16>
    %c3_148 = arith.constant 3 : index
    %c0_149 = arith.constant 0 : index
    %c0_150 = arith.constant 0 : index
    %312 = vector.load %arg4[%c3_148, %c0_149, %c0_150] : memref<4x8x32xbf16, #tpu.memory_space<vmem>>, vector<1x8x32xbf16>
    %313 = vector.shape_cast %312 : vector<1x8x32xbf16> to vector<8x32xbf16>
    %314 = vector.shape_cast %311 : vector<8x32xbf16> to vector<1x8x32xbf16>
    tpu.vector_store %arg4[%c3_148, %c0_149, %c0_150], %314 {strides = array<i32>} : memref<4x8x32xbf16, #tpu.memory_space<vmem>>, vector<1x8x32xbf16>,
    %315 = arith.truncf %306 : vector<8x32xf32> to vector<8x32xbf16>
    %c0_151 = arith.constant 0 : index
    %c0_152 = arith.constant 0 : index
    %c0_153 = arith.constant 0 : index
    %316 = vector.load %arg5[%c0_151, %c0_152, %c0_153] : memref<4x8x32xbf16, #tpu.memory_space<vmem>>, vector<1x8x32xbf16>
    %317 = vector.shape_cast %316 : vector<1x8x32xbf16> to vector<8x32xbf16>
    %318 = vector.shape_cast %315 : vector<8x32xbf16> to vector<1x8x32xbf16>
    tpu.vector_store %arg5[%c0_151, %c0_152, %c0_153], %318 {strides = array<i32>} : memref<4x8x32xbf16, #tpu.memory_space<vmem>>, vector<1x8x32xbf16>,
    return
  }
  func.func @transform_0(%arg0: i32) -> (i32, i32, i32, i32) {
    %c0_i32 = arith.constant 0 : i32
    %c0_i32_0 = arith.constant 0 : i32
    %c0_i32_1 = arith.constant 0 : i32
    %c0_i32_2 = arith.constant 0 : i32
    return %c0_i32, %arg0, %c0_i32_0, %c0_i32_1 : i32, i32, i32, i32
  }
  func.func @transform_1(%arg0: i32) -> (i32, i32, i32, i32) {
    %c0_i32 = arith.constant 0 : i32
    %0 = arith.subi %c0_i32, %arg0 : i32
    %c1_i32 = arith.constant 1 : i32
    %c0_i32_0 = arith.constant 0 : i32
    %c0_i32_1 = arith.constant 0 : i32
    %c0_i32_2 = arith.constant 0 : i32
    return %c1_i32, %0, %c0_i32_0, %c0_i32_1 : i32, i32, i32, i32
  }
  func.func @transform_2(%arg0: i32) -> (i32, i32, i32) {
    %c0_i32 = arith.constant 0 : i32
    %c0_i32_0 = arith.constant 0 : i32
    %c0_i32_1 = arith.constant 0 : i32
    %c0_i32_2 = arith.constant 0 : i32
    return %c0_i32, %c0_i32_0, %c0_i32_1 : i32, i32, i32
  }
  func.func @transform_3(%arg0: i32) -> (i32, i32, i32) {
    %c0_i32 = arith.constant 0 : i32
    %c0_i32_0 = arith.constant 0 : i32
    %c0_i32_1 = arith.constant 0 : i32
    return %arg0, %c0_i32, %c0_i32_0 : i32, i32, i32
  }
  func.func @transform_4(%arg0: i32) -> (i32, i32, i32) {
    %c0_i32 = arith.constant 0 : i32
    %0 = arith.subi %c0_i32, %arg0 : i32
    %c0_i32_0 = arith.constant 0 : i32
    %c0_i32_1 = arith.constant 0 : i32
    %c0_i32_2 = arith.constant 0 : i32
    return %0, %c0_i32_0, %c0_i32_1 : i32, i32, i32
  }
}

</mosaic_0001>

<llo_original>
// kernel: tpu_custom_call.1
$region0: #{tpu_custom_call.1}
  #allocation0 [shape = 'u32[]', space=smem, size = 0x4, offset = 0x4, fixed_abs, tag = 'smem constant byte address 0x4 - core index']
  #allocation1 [shape = 'u32[144,128]{1,0:T(1,128)}', space=vmem, size = 0x12000, scoped, tag = 'internal scratch']
  #allocation2 [shape = 'f32[8,32]{1,0:T(8,128)}', space=vmem, size = 0x1000, scoped, tag = 'scratch operand']
  #allocation3 [shape = 'f32[8,32]{1,0:T(8,128)}', space=vmem, size = 0x1000, scoped, tag = 'scratch operand']
  #allocation4 [shape = 'f32[8,32]{1,0:T(8,128)}', space=vmem, size = 0x1000, scoped, tag = 'scratch operand']
  #allocation5 [shape = 'f32[8,32]{1,0:T(8,128)}', space=vmem, size = 0x1000, scoped, tag = 'scratch operand']
  %s0 = inlined_call_operand.hbm [shape: bf16[2,4,8,128], index: 0, kind: input, shape index: {}]
  %s1 = inlined_call_operand.hbm [shape: bf16[2,4,8,128], index: 1, kind: input, shape index: {}]
  %s2 = inlined_call_operand.hbm [shape: bf16[2,32,128], index: 2, kind: input, shape index: {}]
  %s3 = inlined_call_operand.hbm [shape: bf16[4,8,32], index: 3, kind: output, shape index: {0}]
  %s4 = inlined_call_operand.hbm [shape: bf16[4,8,32], index: 4, kind: output, shape index: {1}]
  %5 = xla_tuple %s3, %s4
  %s6 = sld [smem:[#allocation0]]
  $region46: #{tpu_custom_call.1} parent=0
    _
  %s8 = ssub.s32 1, %s6
  %s9 = scalar_select 0, %s8, %s6
  $region1: #{tpu_custom_call.1} parent=0
    #allocation6 [shape = 'u8[8192]{0}', space=vmem, size = 0x2000, scoped, tag = 'input window, operand 0, single buffered']
    #allocation7 [shape = 's32[1]{0}', space=sflag, size = 0x4, scoped, tag = 'scoped memory for tpu_custom_call.1']
    #allocation8 [shape = 's32[1]{0}', space=sflag, size = 0x4, scoped, tag = 'scoped memory for tpu_custom_call.1']
    #allocation9 [shape = 'u8[8192]{0}', space=vmem, size = 0x2000, scoped, tag = 'input window, operand 1, single buffered']
    #allocation10 [shape = 's32[1]{0}', space=sflag, size = 0x4, scoped, tag = 'scoped memory for tpu_custom_call.1']
    #allocation11 [shape = 'u8[16384]{0}', space=vmem, size = 0x4000, scoped, tag = 'input window, operand 2, single buffered']
    #allocation12 [shape = 'u8[8192]{0}', space=vmem, size = 0x2000, scoped, tag = 'output window, operand 0, single buffered']
    #allocation13 [shape = 'u8[8192]{0}', space=vmem, size = 0x2000, scoped, tag = 'output window, operand 1, single buffered']
    #allocation14 [shape = 's32[1]{0}', space=sflag, size = 0x4, scoped, tag = 'scoped memory for tpu_custom_call.1']
    %10 = vsyncpa [#allocation7], 0
    %11 = vsyncpa [#allocation10], 0
    %12 = vsyncpa [#allocation8], 0
    %13 = vsyncpa [#allocation14], 0
    // Predicated region
    $region2: #{tpu_custom_call.1} parent=1 // pred_check
      _
    $region3: #{tpu_custom_call.1} parent=1 // pred_check_branch
      %15 = sbr.rel (0) target = $region5
    $region4: #{tpu_custom_call.1} parent=1 // pred_region
      %s17 = ssub.s32 256, 256
      %18 = vsyncadd [#allocation7], %s17
      %s19 = sshll.u32 [#allocation6], 4
      %s20 = int_to_ptr.vmem [resolvable:$true] %s19
      %25 = dma.hbm_to_vmem [thread:$0]  %s0, 256, %s20, [#allocation7], 64, 64, 4
    $region5: #{tpu_custom_call.1} parent=1 // pred_fallthru
      _
    // Predicated region
    $region6: #{tpu_custom_call.1} parent=1 // pred_check
      _
    $region7: #{tpu_custom_call.1} parent=1 // pred_check_branch
      %27 = sbr.rel (0) target = $region9
    $region8: #{tpu_custom_call.1} parent=1 // pred_region
      %s28 = ssub.s32 0, 0
      %s29 = smul.u32 4, %s28
      %s31 = ssub.s32 256, 256
      %32 = vsyncadd [#allocation10], %s31
      %s33 = sadd.s32 %s29, 4
      %s34 = smul.addr %s33, 64
      %s35 = scalar_lea.hbm %s1, %s34
      %s36 = sshll.u32 [#allocation9], 4
      %s37 = int_to_ptr.vmem [resolvable:$true] %s36
      %42 = dma.hbm_to_vmem [thread:$0]  %s35, 256, %s37, [#allocation10], 64, 64, 4
    $region9: #{tpu_custom_call.1} parent=1 // pred_fallthru
      _
    // Predicated region
    $region10: #{tpu_custom_call.1} parent=1 // pred_check
      _
    $region11: #{tpu_custom_call.1} parent=1 // pred_check_branch
      %44 = sbr.rel (0) target = $region13
    $region12: #{tpu_custom_call.1} parent=1 // pred_region
      %s46 = ssub.s32 512, 512
      %47 = vsyncadd [#allocation10], %s46
      %s48 = sshll.u32 [#allocation11], 4
      %s49 = int_to_ptr.vmem [resolvable:$true] %s48
      %54 = dma.hbm_to_vmem [thread:$0]  %s2, 512, %s49, [#allocation10], 64, 64, 4
    $region13: #{tpu_custom_call.1} parent=1 // pred_fallthru
      _
    // Predicated region
    $region14: #{tpu_custom_call.1} parent=1 // pred_check
      _
    $region15: #{tpu_custom_call.1} parent=1 // pred_check_branch
      %56 = sbr.rel (0) target = $region17
    $region16: #{tpu_custom_call.1} parent=1 // pred_region
      %57 = dma.done [#allocation7], 256
    $region17: #{tpu_custom_call.1} parent=1 // pred_fallthru
      _
    // Predicated region
    $region18: #{tpu_custom_call.1} parent=1 // pred_check
      _
    $region19: #{tpu_custom_call.1} parent=1 // pred_check_branch
      %59 = sbr.rel (0) target = $region21
    $region20: #{tpu_custom_call.1} parent=1 // pred_region
      %60 = dma.done [#allocation10], 256
    $region21: #{tpu_custom_call.1} parent=1 // pred_fallthru
      _
    // Predicated region
    $region22: #{tpu_custom_call.1} parent=1 // pred_check
      _
    $region23: #{tpu_custom_call.1} parent=1 // pred_check_branch
      %62 = sbr.rel (0) target = $region25
    $region24: #{tpu_custom_call.1} parent=1 // pred_region
      %63 = dma.done [#allocation10], 512
    $region25: #{tpu_custom_call.1} parent=1 // pred_fallthru
      _
    %s64 = ssub.s32 0, 0
    %s65 = smul.u32 4, %s64
    %s66 = ssub.s32 0, 0
    %s67 = smul.u32 4, %s66
    %p69 = scmp.eq.s32.totalorder 0, 0
    // Predicated region
    $region26: #{tpu_custom_call.1} parent=1 // pred_check
      %p70 = pneg %p69
    $region27: #{tpu_custom_call.1} parent=1 // pred_check_branch
      %72 = sbr.rel (%p70) target = $region29
    $region28: #{tpu_custom_call.1} parent=1 // pred_region
      %vm73 = vcmask 261120
      %74 = vst.msk [vmem:[#allocation2] sm:$0xff] %vm73, 0.0
      %75 = vst.msk [vmem:[#allocation3] sm:$0xff] %vm73, 0.0
      %76 = vst.msk [vmem:[#allocation4] sm:$0xff] %vm73, 0.0
      %77 = vst.msk [vmem:[#allocation5] sm:$0xff] %vm73, 0.0
    $region29: #{tpu_custom_call.1} parent=1 // pred_fallthru
      _
    %v78 = vld [vmem:[#allocation11] sm:$0xf]
    %v79 = vld [vmem:[#allocation11 + $0x4] sm:$0xf]
    %v80 = vld [vmem:[#allocation11 + $0x8] sm:$0xf]
    %v81 = vld [vmem:[#allocation11 + $0xc] sm:$0xf]
    %s82 = scalar_lea.vmem [#allocation11], 16
    %v83 = vld [vmem:[%s82] sm:$0xf]
    %v84 = vld [vmem:[%s82 + $0x4] sm:$0xf]
    %v85 = vld [vmem:[%s82 + $0x8] sm:$0xf]
    %v86 = vld [vmem:[%s82 + $0xc] sm:$0xf]
    %v87 = vld [vmem:[#allocation6] sm:$0xf]
    %v88 = vld [vmem:[#allocation2] sm:$0xff]
    %v89 = vld [vmem:[#allocation3] sm:$0xff]
    %v90 = vunpack.c.l.bf16 %v87
    %v91 = vpack.c.bf16 %v88, %v88
    %v96 = vunpack.c.l.b16 %v78
    %v97 = vunpack.c.l.b16 %v79
    %v98 = vunpack.c.l.b16 %v80
    %v99 = vunpack.c.l.b16 %v81
    %v100 = vpack.c.b16 %v97, %v96
    %v101 = vpack.c.b16 %v99, %v98
    %vm104 = vcmask 261120
    %v106 = vsel %vm104, %v91, 0
    %108 = vmatprep.subr.bf16.mxu0 0
    %109 = vmatpush1.bf16.msra.mxu0 %v100
    %110 = vmatprep.subr.bf16.mxu0 0
    %111 = vmatpush1.bf16.msra.mxu0 %v101
    %112 = vmatprep.subr.bf16.mxu0 0
    %113 = vmatpush1.bf16.msra.mxu0 0
    %114 = vmatprep.subr.bf16.mxu0 0
    %115 = vmatpush1.bf16.msra.mxu0 0
    %116 = vmatprep.subr.bf16.mxu0 0
    %117 = vmatpush1.bf16.msra.mxu0 0
    %118 = vmatprep.subr.bf16.mxu0 0
    %119 = vmatpush1.bf16.msra.mxu0 0
    %120 = vmatprep.subr.bf16.mxu0 0
    %121 = vmatpush1.bf16.msra.mxu0 0
    %122 = vmatprep.subr.bf16.mxu0 0
    %123 = vmatpush1.bf16.msra.mxu0 0
    %124 = vmatprep.subr.bf16.mxu0 0
    %125 = vmatpush1.bf16.msra.mxu0 0
    %126 = vmatprep.subr.bf16.mxu0 0
    %127 = vmatpush1.bf16.msra.mxu0 0
    %128 = vmatprep.subr.bf16.mxu0 0
    %129 = vmatpush1.bf16.msra.mxu0 0
    %130 = vmatprep.subr.bf16.mxu0 0
    %131 = vmatpush1.bf16.msra.mxu0 0
    %132 = vmatprep.subr.bf16.mxu0 0
    %133 = vmatpush1.bf16.msra.mxu0 0
    %134 = vmatprep.subr.bf16.mxu0 0
    %135 = vmatpush1.bf16.msra.mxu0 0
    %136 = vmatprep.subr.bf16.mxu0 0
    %137 = vmatpush1.bf16.msra.mxu0 0
    %138 = vmatprep.subr.bf16.mxu0 0
    %139 = vmatpush1.bf16.msra.mxu0 0
    %140 = vmatprep.mubr.bf16.mxu0 0
    %141 = vmatmul.mubr.bf16.gmra.mrb[0].mxu0 %v106
    %v142 = vpop.f32.mrb[0].mxu0
    %v143 = vadd.f32 0.0, %v142
    %v144 = vpop.f32.mrb[0].mxu0
    %v145 = vpop.f32.mrb[0].mxu0
    %v146 = vpop.f32.mrb[0].mxu0
    %147 = vdwg.mxu0
    %v148 = vadd.f32 %v90, %v143
    %v149 = vxor.u32 %v148, 2147483648
    %v150 = vmul.f32 %v149, 1.442695
    %v151 = vpow.pop %v150
    %v152 = vadd.f32 %v151, 1.0
    %v153 = vrcp.pop %v152
    %v154 = vmul.f32 1.0, %v153
    %v155 = vtanh.pop %v148
    %157 = vrot.lane.b32.xlu0 %v89, 32
    %v158 = vpop.permute.xlu0 %157
    %v160 = vmul.f32 %v154, %v158
    %162 = vrot.lane.b32.xlu0 %v155, 64
    %v163 = vpop.permute.xlu0 %162
    %v165 = vmul.f32 %v154, %v163
    %167 = vrot.lane.b32.xlu0 %v165, 32
    %v168 = vpop.permute.xlu0 %167
    %v170 = vadd.f32 %v160, %v168
    %v171 = vtanh.pop %v170
    %173 = vrot.lane.b32.xlu0 %v171, 64
    %v174 = vpop.permute.xlu0 %173
    %v176 = vmul.f32 %v154, %v174
    %s177 = scalar_lea.vmem [#allocation9], 12
    %v178 = vld [vmem:[%s177] sm:$0xf]
    %v179 = vld [vmem:[#allocation4] sm:$0xff]
    %v180 = vld [vmem:[#allocation5] sm:$0xff]
    %v181 = vunpack.c.l.bf16 %v178
    %v182 = vpack.c.bf16 %v179, %v179
    %v187 = vunpack.c.l.b16 %v83
    %v188 = vunpack.c.l.b16 %v84
    %v189 = vunpack.c.l.b16 %v85
    %v190 = vunpack.c.l.b16 %v86
    %v191 = vpack.c.b16 %v188, %v187
    %v192 = vpack.c.b16 %v190, %v189
    %v196 = vsel %vm104, %v182, 0
    %198 = vmatprep.subr.bf16.mxu0 0
    %199 = vmatpush1.bf16.msra.mxu0 %v191
    %200 = vmatprep.subr.bf16.mxu0 0
    %201 = vmatpush1.bf16.msra.mxu0 %v192
    %202 = vmatprep.subr.bf16.mxu0 0
    %203 = vmatpush1.bf16.msra.mxu0 0
    %204 = vmatprep.subr.bf16.mxu0 0
    %205 = vmatpush1.bf16.msra.mxu0 0
    %206 = vmatprep.subr.bf16.mxu0 0
    %207 = vmatpush1.bf16.msra.mxu0 0
    %208 = vmatprep.subr.bf16.mxu0 0
    %209 = vmatpush1.bf16.msra.mxu0 0
    %210 = vmatprep.subr.bf16.mxu0 0
    %211 = vmatpush1.bf16.msra.mxu0 0
    %212 = vmatprep.subr.bf16.mxu0 0
    %213 = vmatpush1.bf16.msra.mxu0 0
    %214 = vmatprep.subr.bf16.mxu0 0
    %215 = vmatpush1.bf16.msra.mxu0 0
    %216 = vmatprep.subr.bf16.mxu0 0
    %217 = vmatpush1.bf16.msra.mxu0 0
    %218 = vmatprep.subr.bf16.mxu0 0
    %219 = vmatpush1.bf16.msra.mxu0 0
    %220 = vmatprep.subr.bf16.mxu0 0
    %221 = vmatpush1.bf16.msra.mxu0 0
    %222 = vmatprep.subr.bf16.mxu0 0
    %223 = vmatpush1.bf16.msra.mxu0 0
    %224 = vmatprep.subr.bf16.mxu0 0
    %225 = vmatpush1.bf16.msra.mxu0 0
    %226 = vmatprep.subr.bf16.mxu0 0
    %227 = vmatpush1.bf16.msra.mxu0 0
    %228 = vmatprep.subr.bf16.mxu0 0
    %229 = vmatpush1.bf16.msra.mxu0 0
    %230 = vmatprep.mubr.bf16.mxu0 0
    %231 = vmatmul.mubr.bf16.gmra.mrb[0].mxu0 %v196
    %v232 = vpop.f32.mrb[0].mxu0
    %v233 = vadd.f32 0.0, %v232
    %v234 = vpop.f32.mrb[0].mxu0
    %v235 = vpop.f32.mrb[0].mxu0
    %v236 = vpop.f32.mrb[0].mxu0
    %237 = vdwg.mxu0
    %v238 = vadd.f32 %v181, %v233
    %v239 = vxor.u32 %v238, 2147483648
    %v240 = vmul.f32 %v239, 1.442695
    %v241 = vpow.pop %v240
    %v242 = vadd.f32 %v241, 1.0
    %v243 = vrcp.pop %v242
    %v244 = vmul.f32 1.0, %v243
    %v245 = vtanh.pop %v238
    %247 = vrot.lane.b32.xlu0 %v180, 32
    %v248 = vpop.permute.xlu0 %247
    %v250 = vmul.f32 %v244, %v248
    %252 = vrot.lane.b32.xlu0 %v245, 64
    %v253 = vpop.permute.xlu0 %252
    %v255 = vmul.f32 %v244, %v253
    %257 = vrot.lane.b32.xlu0 %v255, 32
    %v258 = vpop.permute.xlu0 %257
    %v260 = vadd.f32 %v250, %v258
    %v261 = vtanh.pop %v260
    %263 = vrot.lane.b32.xlu0 %v261, 64
    %v264 = vpop.permute.xlu0 %263
    %v266 = vmul.f32 %v244, %v264
    %268 = vrot.lane.b32.xlu0 %v176, 32
    %v269 = vpop.permute.xlu0 %268
    %271 = vst.msk [vmem:[#allocation2] sm:$0xff] %vm104, %v269
    %273 = vrot.lane.b32.xlu0 %v170, 96
    %v274 = vpop.permute.xlu0 %273
    %276 = vst.msk [vmem:[#allocation3] sm:$0xff] %vm104, %v274
    %278 = vrot.lane.b32.xlu0 %v266, 32
    %v279 = vpop.permute.xlu0 %278
    %281 = vst.msk [vmem:[#allocation4] sm:$0xff] %vm104, %v279
    %283 = vrot.lane.b32.xlu0 %v260, 96
    %v284 = vpop.permute.xlu0 %283
    %286 = vst.msk [vmem:[#allocation5] sm:$0xff] %vm104, %v284
    %v287 = vpack.c.bf16 %v176, %v176
    %v289 = vunpack.c.l.b16 %v287
    %v290 = vpack.c.b16 %v289, %v289
    %291 = vrot.lane.b32.xlu0 %v290, 32
    %v292 = vpop.permute.xlu0 %291
    %vm294 = vcmask 257024
    %295 = vst.msk [vmem:[#allocation12] sm:$0xf] %vm294, %v292
    %v296 = vpack.c.bf16 %v266, %v266
    %v298 = vunpack.c.l.b16 %v296
    %v299 = vpack.c.b16 %v298, %v298
    %300 = vrot.lane.b32.xlu0 %v299, 32
    %v301 = vpop.permute.xlu0 %300
    %s303 = scalar_lea.vmem [#allocation13], 12
    %304 = vst.msk [vmem:[%s303] sm:$0xf] %vm294, %v301
    %s305 = scalar_lea.vmem [#allocation6], 4
    %v306 = vld [vmem:[%s305] sm:$0xf]
    %v307 = vld [vmem:[#allocation2] sm:$0xff]
    %v308 = vld [vmem:[#allocation3] sm:$0xff]
    %v309 = vunpack.c.l.bf16 %v306
    %v310 = vpack.c.bf16 %v307, %v307
    %v312 = vsel %vm104, %v310, 0
    %314 = vmatprep.subr.bf16.mxu0 0
    %315 = vmatpush1.bf16.msra.mxu0 %v100
    %316 = vmatprep.subr.bf16.mxu0 0
    %317 = vmatpush1.bf16.msra.mxu0 %v101
    %318 = vmatprep.subr.bf16.mxu0 0
    %319 = vmatpush1.bf16.msra.mxu0 0
    %320 = vmatprep.subr.bf16.mxu0 0
    %321 = vmatpush1.bf16.msra.mxu0 0
    %322 = vmatprep.subr.bf16.mxu0 0
    %323 = vmatpush1.bf16.msra.mxu0 0
    %324 = vmatprep.subr.bf16.mxu0 0
    %325 = vmatpush1.bf16.msra.mxu0 0
    %326 = vmatprep.subr.bf16.mxu0 0
    %327 = vmatpush1.bf16.msra.mxu0 0
    %328 = vmatprep.subr.bf16.mxu0 0
    %329 = vmatpush1.bf16.msra.mxu0 0
    %330 = vmatprep.subr.bf16.mxu0 0
    %331 = vmatpush1.bf16.msra.mxu0 0
    %332 = vmatprep.subr.bf16.mxu0 0
    %333 = vmatpush1.bf16.msra.mxu0 0
    %334 = vmatprep.subr.bf16.mxu0 0
    %335 = vmatpush1.bf16.msra.mxu0 0
    %336 = vmatprep.subr.bf16.mxu0 0
    %337 = vmatpush1.bf16.msra.mxu0 0
    %338 = vmatprep.subr.bf16.mxu0 0
    %339 = vmatpush1.bf16.msra.mxu0 0
    %340 = vmatprep.subr.bf16.mxu0 0
    %341 = vmatpush1.bf16.msra.mxu0 0
    %342 = vmatprep.subr.bf16.mxu0 0
    %343 = vmatpush1.bf16.msra.mxu0 0
    %344 = vmatprep.subr.bf16.mxu0 0
    %345 = vmatpush1.bf16.msra.mxu0 0
    %346 = vmatprep.mubr.bf16.mxu0 0
    %347 = vmatmul.mubr.bf16.gmra.mrb[0].mxu0 %v312
    %v348 = vpop.f32.mrb[0].mxu0
    %v349 = vadd.f32 0.0, %v348
    %v350 = vpop.f32.mrb[0].mxu0
    %v351 = vpop.f32.mrb[0].mxu0
    %v352 = vpop.f32.mrb[0].mxu0
    %353 = vdwg.mxu0
    %v354 = vadd.f32 %v309, %v349
    %v355 = vxor.u32 %v354, 2147483648
    %v356 = vmul.f32 %v355, 1.442695
    %v357 = vpow.pop %v356
    %v358 = vadd.f32 %v357, 1.0
    %v359 = vrcp.pop %v358
    %v360 = vmul.f32 1.0, %v359
    %v361 = vtanh.pop %v354
    %363 = vrot.lane.b32.xlu0 %v308, 32
    %v364 = vpop.permute.xlu0 %363
    %v366 = vmul.f32 %v360, %v364
    %368 = vrot.lane.b32.xlu0 %v361, 64
    %v369 = vpop.permute.xlu0 %368
    %v371 = vmul.f32 %v360, %v369
    %373 = vrot.lane.b32.xlu0 %v371, 32
    %v374 = vpop.permute.xlu0 %373
    %v376 = vadd.f32 %v366, %v374
    %v377 = vtanh.pop %v376
    %379 = vrot.lane.b32.xlu0 %v377, 64
    %v380 = vpop.permute.xlu0 %379
    %v382 = vmul.f32 %v360, %v380
    %s383 = scalar_lea.vmem [#allocation9], 8
    %v384 = vld [vmem:[%s383] sm:$0xf]
    %v385 = vld [vmem:[#allocation4] sm:$0xff]
    %v386 = vld [vmem:[#allocation5] sm:$0xff]
    %v387 = vunpack.c.l.bf16 %v384
    %v388 = vpack.c.bf16 %v385, %v385
    %v390 = vsel %vm104, %v388, 0
    %392 = vmatprep.subr.bf16.mxu0 0
    %393 = vmatpush1.bf16.msra.mxu0 %v191
    %394 = vmatprep.subr.bf16.mxu0 0
    %395 = vmatpush1.bf16.msra.mxu0 %v192
    %396 = vmatprep.subr.bf16.mxu0 0
    %397 = vmatpush1.bf16.msra.mxu0 0
    %398 = vmatprep.subr.bf16.mxu0 0
    %399 = vmatpush1.bf16.msra.mxu0 0
    %400 = vmatprep.subr.bf16.mxu0 0
    %401 = vmatpush1.bf16.msra.mxu0 0
    %402 = vmatprep.subr.bf16.mxu0 0
    %403 = vmatpush1.bf16.msra.mxu0 0
    %404 = vmatprep.subr.bf16.mxu0 0
    %405 = vmatpush1.bf16.msra.mxu0 0
    %406 = vmatprep.subr.bf16.mxu0 0
    %407 = vmatpush1.bf16.msra.mxu0 0
    %408 = vmatprep.subr.bf16.mxu0 0
    %409 = vmatpush1.bf16.msra.mxu0 0
    %410 = vmatprep.subr.bf16.mxu0 0
    %411 = vmatpush1.bf16.msra.mxu0 0
    %412 = vmatprep.subr.bf16.mxu0 0
    %413 = vmatpush1.bf16.msra.mxu0 0
    %414 = vmatprep.subr.bf16.mxu0 0
    %415 = vmatpush1.bf16.msra.mxu0 0
    %416 = vmatprep.subr.bf16.mxu0 0
    %417 = vmatpush1.bf16.msra.mxu0 0
    %418 = vmatprep.subr.bf16.mxu0 0
    %419 = vmatpush1.bf16.msra.mxu0 0
    %420 = vmatprep.subr.bf16.mxu0 0
    %421 = vmatpush1.bf16.msra.mxu0 0
    %422 = vmatprep.subr.bf16.mxu0 0
    %423 = vmatpush1.bf16.msra.mxu0 0
    %424 = vmatprep.mubr.bf16.mxu0 0
    %425 = vmatmul.mubr.bf16.gmra.mrb[0].mxu0 %v390
    %v426 = vpop.f32.mrb[0].mxu0
    %v427 = vadd.f32 0.0, %v426
    %v428 = vpop.f32.mrb[0].mxu0
    %v429 = vpop.f32.mrb[0].mxu0
    %v430 = vpop.f32.mrb[0].mxu0
    %431 = vdwg.mxu0
    %v432 = vadd.f32 %v387, %v427
    %v433 = vxor.u32 %v432, 2147483648
    %v434 = vmul.f32 %v433, 1.442695
    %v435 = vpow.pop %v434
    %v436 = vadd.f32 %v435, 1.0
    %v437 = vrcp.pop %v436
    %v438 = vmul.f32 1.0, %v437
    %v439 = vtanh.pop %v432
    %441 = vrot.lane.b32.xlu0 %v386, 32
    %v442 = vpop.permute.xlu0 %441
    %v444 = vmul.f32 %v438, %v442
    %446 = vrot.lane.b32.xlu0 %v439, 64
    %v447 = vpop.permute.xlu0 %446
    %v449 = vmul.f32 %v438, %v447
    %451 = vrot.lane.b32.xlu0 %v449, 32
    %v452 = vpop.permute.xlu0 %451
    %v454 = vadd.f32 %v444, %v452
    %v455 = vtanh.pop %v454
    %457 = vrot.lane.b32.xlu0 %v455, 64
    %v458 = vpop.permute.xlu0 %457
    %v460 = vmul.f32 %v438, %v458
    %462 = vrot.lane.b32.xlu0 %v382, 32
    %v463 = vpop.permute.xlu0 %462
    %465 = vst.msk [vmem:[#allocation2] sm:$0xff] %vm104, %v463
    %467 = vrot.lane.b32.xlu0 %v376, 96
    %v468 = vpop.permute.xlu0 %467
    %470 = vst.msk [vmem:[#allocation3] sm:$0xff] %vm104, %v468
    %472 = vrot.lane.b32.xlu0 %v460, 32
    %v473 = vpop.permute.xlu0 %472
    %475 = vst.msk [vmem:[#allocation4] sm:$0xff] %vm104, %v473
    %477 = vrot.lane.b32.xlu0 %v454, 96
    %v478 = vpop.permute.xlu0 %477
    %480 = vst.msk [vmem:[#allocation5] sm:$0xff] %vm104, %v478
    %v481 = vpack.c.bf16 %v382, %v382
    %v483 = vunpack.c.l.b16 %v481
    %v484 = vpack.c.b16 %v483, %v483
    %485 = vrot.lane.b32.xlu0 %v484, 32
    %v486 = vpop.permute.xlu0 %485
    %s488 = scalar_lea.vmem [#allocation12], 4
    %489 = vst.msk [vmem:[%s488] sm:$0xf] %vm294, %v486
    %v490 = vpack.c.bf16 %v460, %v460
    %v492 = vunpack.c.l.b16 %v490
    %v493 = vpack.c.b16 %v492, %v492
    %494 = vrot.lane.b32.xlu0 %v493, 32
    %v495 = vpop.permute.xlu0 %494
    %s497 = scalar_lea.vmem [#allocation13], 8
    %498 = vst.msk [vmem:[%s497] sm:$0xf] %vm294, %v495
    %s499 = scalar_lea.vmem [#allocation6], 8
    %v500 = vld [vmem:[%s499] sm:$0xf]
    %v501 = vld [vmem:[#allocation2] sm:$0xff]
    %v502 = vld [vmem:[#allocation3] sm:$0xff]
    %v503 = vunpack.c.l.bf16 %v500
    %v504 = vpack.c.bf16 %v501, %v501
    %v506 = vsel %vm104, %v504, 0
    %508 = vmatprep.subr.bf16.mxu0 0
    %509 = vmatpush1.bf16.msra.mxu0 %v100
    %510 = vmatprep.subr.bf16.mxu0 0
    %511 = vmatpush1.bf16.msra.mxu0 %v101
    %512 = vmatprep.subr.bf16.mxu0 0
    %513 = vmatpush1.bf16.msra.mxu0 0
    %514 = vmatprep.subr.bf16.mxu0 0
    %515 = vmatpush1.bf16.msra.mxu0 0
    %516 = vmatprep.subr.bf16.mxu0 0
    %517 = vmatpush1.bf16.msra.mxu0 0
    %518 = vmatprep.subr.bf16.mxu0 0
    %519 = vmatpush1.bf16.msra.mxu0 0
    %520 = vmatprep.subr.bf16.mxu0 0
    %521 = vmatpush1.bf16.msra.mxu0 0
    %522 = vmatprep.subr.bf16.mxu0 0
    %523 = vmatpush1.bf16.msra.mxu0 0
    %524 = vmatprep.subr.bf16.mxu0 0
    %525 = vmatpush1.bf16.msra.mxu0 0
    %526 = vmatprep.subr.bf16.mxu0 0
    %527 = vmatpush1.bf16.msra.mxu0 0
    %528 = vmatprep.subr.bf16.mxu0 0
    %529 = vmatpush1.bf16.msra.mxu0 0
    %530 = vmatprep.subr.bf16.mxu0 0
    %531 = vmatpush1.bf16.msra.mxu0 0
    %532 = vmatprep.subr.bf16.mxu0 0
    %533 = vmatpush1.bf16.msra.mxu0 0
    %534 = vmatprep.subr.bf16.mxu0 0
    %535 = vmatpush1.bf16.msra.mxu0 0
    %536 = vmatprep.subr.bf16.mxu0 0
    %537 = vmatpush1.bf16.msra.mxu0 0
    %538 = vmatprep.subr.bf16.mxu0 0
    %539 = vmatpush1.bf16.msra.mxu0 0
    %540 = vmatprep.mubr.bf16.mxu0 0
    %541 = vmatmul.mubr.bf16.gmra.mrb[0].mxu0 %v506
    %v542 = vpop.f32.mrb[0].mxu0
    %v543 = vadd.f32 0.0, %v542
    %v544 = vpop.f32.mrb[0].mxu0
    %v545 = vpop.f32.mrb[0].mxu0
    %v546 = vpop.f32.mrb[0].mxu0
    %547 = vdwg.mxu0
    %v548 = vadd.f32 %v503, %v543
    %v549 = vxor.u32 %v548, 2147483648
    %v550 = vmul.f32 %v549, 1.442695
    %v551 = vpow.pop %v550
    %v552 = vadd.f32 %v551, 1.0
    %v553 = vrcp.pop %v552
    %v554 = vmul.f32 1.0, %v553
    %v555 = vtanh.pop %v548
    %557 = vrot.lane.b32.xlu0 %v502, 32
    %v558 = vpop.permute.xlu0 %557
    %v560 = vmul.f32 %v554, %v558
    %562 = vrot.lane.b32.xlu0 %v555, 64
    %v563 = vpop.permute.xlu0 %562
    %v565 = vmul.f32 %v554, %v563
    %567 = vrot.lane.b32.xlu0 %v565, 32
    %v568 = vpop.permute.xlu0 %567
    %v570 = vadd.f32 %v560, %v568
    %v571 = vtanh.pop %v570
    %573 = vrot.lane.b32.xlu0 %v571, 64
    %v574 = vpop.permute.xlu0 %573
    %v576 = vmul.f32 %v554, %v574
    %s577 = scalar_lea.vmem [#allocation9], 4
    %v578 = vld [vmem:[%s577] sm:$0xf]
    %v579 = vld [vmem:[#allocation4] sm:$0xff]
    %v580 = vld [vmem:[#allocation5] sm:$0xff]
    %v581 = vunpack.c.l.bf16 %v578
    %v582 = vpack.c.bf16 %v579, %v579
    %v584 = vsel %vm104, %v582, 0
    %586 = vmatprep.subr.bf16.mxu0 0
    %587 = vmatpush1.bf16.msra.mxu0 %v191
    %588 = vmatprep.subr.bf16.mxu0 0
    %589 = vmatpush1.bf16.msra.mxu0 %v192
    %590 = vmatprep.subr.bf16.mxu0 0
    %591 = vmatpush1.bf16.msra.mxu0 0
    %592 = vmatprep.subr.bf16.mxu0 0
    %593 = vmatpush1.bf16.msra.mxu0 0
    %594 = vmatprep.subr.bf16.mxu0 0
    %595 = vmatpush1.bf16.msra.mxu0 0
    %596 = vmatprep.subr.bf16.mxu0 0
    %597 = vmatpush1.bf16.msra.mxu0 0
    %598 = vmatprep.subr.bf16.mxu0 0
    %599 = vmatpush1.bf16.msra.mxu0 0
    %600 = vmatprep.subr.bf16.mxu0 0
    %601 = vmatpush1.bf16.msra.mxu0 0
    %602 = vmatprep.subr.bf16.mxu0 0
    %603 = vmatpush1.bf16.msra.mxu0 0
    %604 = vmatprep.subr.bf16.mxu0 0
    %605 = vmatpush1.bf16.msra.mxu0 0
    %606 = vmatprep.subr.bf16.mxu0 0
    %607 = vmatpush1.bf16.msra.mxu0 0
    %608 = vmatprep.subr.bf16.mxu0 0
    %609 = vmatpush1.bf16.msra.mxu0 0
    %610 = vmatprep.subr.bf16.mxu0 0
    %611 = vmatpush1.bf16.msra.mxu0 0
    %612 = vmatprep.subr.bf16.mxu0 0
    %613 = vmatpush1.bf16.msra.mxu0 0
    %614 = vmatprep.subr.bf16.mxu0 0
    %615 = vmatpush1.bf16.msra.mxu0 0
    %616 = vmatprep.subr.bf16.mxu0 0
    %617 = vmatpush1.bf16.msra.mxu0 0
    %618 = vmatprep.mubr.bf16.mxu0 0
    %619 = vmatmul.mubr.bf16.gmra.mrb[0].mxu0 %v584
    %v620 = vpop.f32.mrb[0].mxu0
    %v621 = vadd.f32 0.0, %v620
    %v622 = vpop.f32.mrb[0].mxu0
    %v623 = vpop.f32.mrb[0].mxu0
    %v624 = vpop.f32.mrb[0].mxu0
    %625 = vdwg.mxu0
    %v626 = vadd.f32 %v581, %v621
    %v627 = vxor.u32 %v626, 2147483648
    %v628 = vmul.f32 %v627, 1.442695
    %v629 = vpow.pop %v628
    %v630 = vadd.f32 %v629, 1.0
    %v631 = vrcp.pop %v630
    %v632 = vmul.f32 1.0, %v631
    %v633 = vtanh.pop %v626
    %635 = vrot.lane.b32.xlu0 %v580, 32
    %v636 = vpop.permute.xlu0 %635
    %v638 = vmul.f32 %v632, %v636
    %640 = vrot.lane.b32.xlu0 %v633, 64
    %v641 = vpop.permute.xlu0 %640
    %v643 = vmul.f32 %v632, %v641
    %645 = vrot.lane.b32.xlu0 %v643, 32
    %v646 = vpop.permute.xlu0 %645
    %v648 = vadd.f32 %v638, %v646
    %v649 = vtanh.pop %v648
    %651 = vrot.lane.b32.xlu0 %v649, 64
    %v652 = vpop.permute.xlu0 %651
    %v654 = vmul.f32 %v632, %v652
    %656 = vrot.lane.b32.xlu0 %v576, 32
    %v657 = vpop.permute.xlu0 %656
    %659 = vst.msk [vmem:[#allocation2] sm:$0xff] %vm104, %v657
    %661 = vrot.lane.b32.xlu0 %v570, 96
    %v662 = vpop.permute.xlu0 %661
    %664 = vst.msk [vmem:[#allocation3] sm:$0xff] %vm104, %v662
    %666 = vrot.lane.b32.xlu0 %v654, 32
    %v667 = vpop.permute.xlu0 %666
    %669 = vst.msk [vmem:[#allocation4] sm:$0xff] %vm104, %v667
    %671 = vrot.lane.b32.xlu0 %v648, 96
    %v672 = vpop.permute.xlu0 %671
    %674 = vst.msk [vmem:[#allocation5] sm:$0xff] %vm104, %v672
    %v675 = vpack.c.bf16 %v576, %v576
    %v677 = vunpack.c.l.b16 %v675
    %v678 = vpack.c.b16 %v677, %v677
    %679 = vrot.lane.b32.xlu0 %v678, 32
    %v680 = vpop.permute.xlu0 %679
    %s682 = scalar_lea.vmem [#allocation12], 8
    %683 = vst.msk [vmem:[%s682] sm:$0xf] %vm294, %v680
    %v684 = vpack.c.bf16 %v654, %v654
    %v686 = vunpack.c.l.b16 %v684
    %v687 = vpack.c.b16 %v686, %v686
    %688 = vrot.lane.b32.xlu0 %v687, 32
    %v689 = vpop.permute.xlu0 %688
    %s691 = scalar_lea.vmem [#allocation13], 4
    %692 = vst.msk [vmem:[%s691] sm:$0xf] %vm294, %v689
    %s693 = scalar_lea.vmem [#allocation6], 12
    %v694 = vld [vmem:[%s693] sm:$0xf]
    %v695 = vld [vmem:[#allocation2] sm:$0xff]
    %v696 = vld [vmem:[#allocation3] sm:$0xff]
    %v697 = vunpack.c.l.bf16 %v694
    %v698 = vpack.c.bf16 %v695, %v695
    %v700 = vsel %vm104, %v698, 0
    %702 = vmatprep.subr.bf16.mxu0 0
    %703 = vmatpush1.bf16.msra.mxu0 %v100
    %704 = vmatprep.subr.bf16.mxu0 0
    %705 = vmatpush1.bf16.msra.mxu0 %v101
    %706 = vmatprep.subr.bf16.mxu0 0
    %707 = vmatpush1.bf16.msra.mxu0 0
    %708 = vmatprep.subr.bf16.mxu0 0
    %709 = vmatpush1.bf16.msra.mxu0 0
    %710 = vmatprep.subr.bf16.mxu0 0
    %711 = vmatpush1.bf16.msra.mxu0 0
    %712 = vmatprep.subr.bf16.mxu0 0
    %713 = vmatpush1.bf16.msra.mxu0 0
    %714 = vmatprep.subr.bf16.mxu0 0
    %715 = vmatpush1.bf16.msra.mxu0 0
    %716 = vmatprep.subr.bf16.mxu0 0
    %717 = vmatpush1.bf16.msra.mxu0 0
    %718 = vmatprep.subr.bf16.mxu0 0
    %719 = vmatpush1.bf16.msra.mxu0 0
    %720 = vmatprep.subr.bf16.mxu0 0
    %721 = vmatpush1.bf16.msra.mxu0 0
    %722 = vmatprep.subr.bf16.mxu0 0
    %723 = vmatpush1.bf16.msra.mxu0 0
    %724 = vmatprep.subr.bf16.mxu0 0
    %725 = vmatpush1.bf16.msra.mxu0 0
    %726 = vmatprep.subr.bf16.mxu0 0
    %727 = vmatpush1.bf16.msra.mxu0 0
    %728 = vmatprep.subr.bf16.mxu0 0
    %729 = vmatpush1.bf16.msra.mxu0 0
    %730 = vmatprep.subr.bf16.mxu0 0
    %731 = vmatpush1.bf16.msra.mxu0 0
    %732 = vmatprep.subr.bf16.mxu0 0
    %733 = vmatpush1.bf16.msra.mxu0 0
    %734 = vmatprep.mubr.bf16.mxu0 0
    %735 = vmatmul.mubr.bf16.gmra.mrb[0].mxu0 %v700
    %v736 = vpop.f32.mrb[0].mxu0
    %v737 = vadd.f32 0.0, %v736
    %v738 = vpop.f32.mrb[0].mxu0
    %v739 = vpop.f32.mrb[0].mxu0
    %v740 = vpop.f32.mrb[0].mxu0
    %741 = vdwg.mxu0
    %v742 = vadd.f32 %v697, %v737
    %v743 = vxor.u32 %v742, 2147483648
    %v744 = vmul.f32 %v743, 1.442695
    %v745 = vpow.pop %v744
    %v746 = vadd.f32 %v745, 1.0
    %v747 = vrcp.pop %v746
    %v748 = vmul.f32 1.0, %v747
    %v749 = vtanh.pop %v742
    %751 = vrot.lane.b32.xlu0 %v696, 32
    %v752 = vpop.permute.xlu0 %751
    %v754 = vmul.f32 %v748, %v752
    %756 = vrot.lane.b32.xlu0 %v749, 64
    %v757 = vpop.permute.xlu0 %756
    %v759 = vmul.f32 %v748, %v757
    %761 = vrot.lane.b32.xlu0 %v759, 32
    %v762 = vpop.permute.xlu0 %761
    %v764 = vadd.f32 %v754, %v762
    %v765 = vtanh.pop %v764
    %767 = vrot.lane.b32.xlu0 %v765, 64
    %v768 = vpop.permute.xlu0 %767
    %v770 = vmul.f32 %v748, %v768
    %v771 = vld [vmem:[#allocation9] sm:$0xf]
    %v772 = vld [vmem:[#allocation4] sm:$0xff]
    %v773 = vld [vmem:[#allocation5] sm:$0xff]
    %v774 = vunpack.c.l.bf16 %v771
    %v775 = vpack.c.bf16 %v772, %v772
    %v777 = vsel %vm104, %v775, 0
    %779 = vmatprep.subr.bf16.mxu0 0
    %780 = vmatpush1.bf16.msra.mxu0 %v191
    %781 = vmatprep.subr.bf16.mxu0 0
    %782 = vmatpush1.bf16.msra.mxu0 %v192
    %783 = vmatprep.subr.bf16.mxu0 0
    %784 = vmatpush1.bf16.msra.mxu0 0
    %785 = vmatprep.subr.bf16.mxu0 0
    %786 = vmatpush1.bf16.msra.mxu0 0
    %787 = vmatprep.subr.bf16.mxu0 0
    %788 = vmatpush1.bf16.msra.mxu0 0
    %789 = vmatprep.subr.bf16.mxu0 0
    %790 = vmatpush1.bf16.msra.mxu0 0
    %791 = vmatprep.subr.bf16.mxu0 0
    %792 = vmatpush1.bf16.msra.mxu0 0
    %793 = vmatprep.subr.bf16.mxu0 0
    %794 = vmatpush1.bf16.msra.mxu0 0
    %795 = vmatprep.subr.bf16.mxu0 0
    %796 = vmatpush1.bf16.msra.mxu0 0
    %797 = vmatprep.subr.bf16.mxu0 0
    %798 = vmatpush1.bf16.msra.mxu0 0
    %799 = vmatprep.subr.bf16.mxu0 0
    %800 = vmatpush1.bf16.msra.mxu0 0
    %801 = vmatprep.subr.bf16.mxu0 0
    %802 = vmatpush1.bf16.msra.mxu0 0
    %803 = vmatprep.subr.bf16.mxu0 0
    %804 = vmatpush1.bf16.msra.mxu0 0
    %805 = vmatprep.subr.bf16.mxu0 0
    %806 = vmatpush1.bf16.msra.mxu0 0
    %807 = vmatprep.subr.bf16.mxu0 0
    %808 = vmatpush1.bf16.msra.mxu0 0
    %809 = vmatprep.subr.bf16.mxu0 0
    %810 = vmatpush1.bf16.msra.mxu0 0
    %811 = vmatprep.mubr.bf16.mxu0 0
    %812 = vmatmul.mubr.bf16.gmra.mrb[0].mxu0 %v777
    %v813 = vpop.f32.mrb[0].mxu0
    %v814 = vadd.f32 0.0, %v813
    %v815 = vpop.f32.mrb[0].mxu0
    %v816 = vpop.f32.mrb[0].mxu0
    %v817 = vpop.f32.mrb[0].mxu0
    %818 = vdwg.mxu0
    %v819 = vadd.f32 %v774, %v814
    %v820 = vxor.u32 %v819, 2147483648
    %v821 = vmul.f32 %v820, 1.442695
    %v822 = vpow.pop %v821
    %v823 = vadd.f32 %v822, 1.0
    %v824 = vrcp.pop %v823
    %v825 = vmul.f32 1.0, %v824
    %v826 = vtanh.pop %v819
    %828 = vrot.lane.b32.xlu0 %v773, 32
    %v829 = vpop.permute.xlu0 %828
    %v831 = vmul.f32 %v825, %v829
    %833 = vrot.lane.b32.xlu0 %v826, 64
    %v834 = vpop.permute.xlu0 %833
    %v836 = vmul.f32 %v825, %v834
    %838 = vrot.lane.b32.xlu0 %v836, 32
    %v839 = vpop.permute.xlu0 %838
    %v841 = vadd.f32 %v831, %v839
    %v842 = vtanh.pop %v841
    %844 = vrot.lane.b32.xlu0 %v842, 64
    %v845 = vpop.permute.xlu0 %844
    %v847 = vmul.f32 %v825, %v845
    %849 = vrot.lane.b32.xlu0 %v770, 32
    %v850 = vpop.permute.xlu0 %849
    %852 = vst.msk [vmem:[#allocation2] sm:$0xff] %vm104, %v850
    %854 = vrot.lane.b32.xlu0 %v764, 96
    %v855 = vpop.permute.xlu0 %854
    %857 = vst.msk [vmem:[#allocation3] sm:$0xff] %vm104, %v855
    %859 = vrot.lane.b32.xlu0 %v847, 32
    %v860 = vpop.permute.xlu0 %859
    %862 = vst.msk [vmem:[#allocation4] sm:$0xff] %vm104, %v860
    %864 = vrot.lane.b32.xlu0 %v841, 96
    %v865 = vpop.permute.xlu0 %864
    %867 = vst.msk [vmem:[#allocation5] sm:$0xff] %vm104, %v865
    %v868 = vpack.c.bf16 %v770, %v770
    %v870 = vunpack.c.l.b16 %v868
    %v871 = vpack.c.b16 %v870, %v870
    %872 = vrot.lane.b32.xlu0 %v871, 32
    %v873 = vpop.permute.xlu0 %872
    %s875 = scalar_lea.vmem [#allocation12], 12
    %876 = vst.msk [vmem:[%s875] sm:$0xf] %vm294, %v873
    %v877 = vpack.c.bf16 %v847, %v847
    %v879 = vunpack.c.l.b16 %v877
    %v880 = vpack.c.b16 %v879, %v879
    %881 = vrot.lane.b32.xlu0 %v880, 32
    %v882 = vpop.permute.xlu0 %881
    %884 = vst.msk [vmem:[#allocation13] sm:$0xf] %vm294, %v882
    // Predicated region
    $region30: #{tpu_custom_call.1} parent=1 // pred_check
      _
    $region31: #{tpu_custom_call.1} parent=1 // pred_check_branch
      %886 = sbr.rel (0) target = $region33
    $region32: #{tpu_custom_call.1} parent=1 // pred_region
      %s888 = ssub.s32 256, 256
      %889 = vsyncadd [#allocation8], %s888
      %s890 = sshll.u32 [#allocation12], 4
      %s891 = int_to_ptr.vmem [resolvable:$true] %s890
      %896 = dma.vmem_to_hbm [thread:$0]  %s891, 256, %s3, [#allocation8], 64, 64, 4
    $region33: #{tpu_custom_call.1} parent=1 // pred_fallthru
      _
    // Predicated region
    $region34: #{tpu_custom_call.1} parent=1 // pred_check
      _
    $region35: #{tpu_custom_call.1} parent=1 // pred_check_branch
      %898 = sbr.rel (0) target = $region37
    $region36: #{tpu_custom_call.1} parent=1 // pred_region
      %s899 = ssub.s32 0, 0
      %s900 = smul.u32 4, %s899
      %s902 = ssub.s32 256, 256
      %903 = vsyncadd [#allocation14], %s902
      %s904 = smul.addr %s900, 64
      %s905 = scalar_lea.hbm %s4, %s904
      %s906 = sshll.u32 [#allocation13], 4
      %s907 = int_to_ptr.vmem [resolvable:$true] %s906
      %912 = dma.vmem_to_hbm [thread:$0]  %s907, 256, %s905, [#allocation14], 64, 64, 4
    $region37: #{tpu_custom_call.1} parent=1 // pred_fallthru
      _
    // Predicated region
    $region38: #{tpu_custom_call.1} parent=1 // pred_check
      _
    $region39: #{tpu_custom_call.1} parent=1 // pred_check_branch
      %914 = sbr.rel (0) target = $region41
    $region40: #{tpu_custom_call.1} parent=1 // pred_region
      %915 = dma.done [#allocation8], 256
    $region41: #{tpu_custom_call.1} parent=1 // pred_fallthru
      _
    // Predicated region
    $region42: #{tpu_custom_call.1} parent=1 // pred_check
      _
    $region43: #{tpu_custom_call.1} parent=1 // pred_check_branch
      %917 = sbr.rel (0) target = $region45
    $region44: #{tpu_custom_call.1} parent=1 // pred_region
      %918 = dma.done [#allocation14], 256
    $region45: #{tpu_custom_call.1} parent=1 // pred_fallthru
      _
    %919 = vsyncpa [#allocation7], 1
    %920 = vsyncpa [#allocation10], 1
    %921 = vsyncpa [#allocation8], 1
    %922 = vsyncpa [#allocation14], 1

</llo_original>
